<compile_context>
chip_gen: v7x
topology: tpu7x:2x2x1
jax: 0.10.0
libtpu: 0.0.40
codegen_flags: <defaults>
</compile_context>

<pallas_src>
import math
from functools import partial

import jax
import jax.numpy as jnp
import numpy as np
from jax import lax
from jax.experimental import pallas as pl
from jax.experimental.pallas import tpu as pltpu


# ------------------------- per-generation sizing ------------------------------

def _physical_vmem_bytes() -> int:
    try:
        info = pltpu.get_tpu_info()
        for attr in ("vmem_capacity_bytes", "vmem_bytes", "vmem_size_bytes"):
            cap = getattr(info, attr, None)
            if isinstance(cap, (int, np.integer)) and cap > 0:
                return int(cap)
    except Exception:
        pass
    return 64 << 20                     # conservative floor: v7x per-TC VMEM


_VMEM_PHYS = _physical_vmem_bytes()
if _VMEM_PHYS >= (100 << 20):           # v5e / v6e: 128 MiB physical VMEM
    _LINEAR_TILES = (512, 1024, 1024)   # amortize ~0.35us per-grid-step cost
    _VMEM_CAP = 96 << 20
else:                                   # v7x: 64 MiB -> stay conservative;
    _LINEAR_TILES = (256, 512, 512)     # grow tk before tm/tn if enlarging
    _VMEM_CAP = 40 << 20


# ------------------------- tiled linear (bf16 MXU) -----------------------------

def _matmul_kernel(x_ref, w_ref, o_ref, acc_ref):
    # x: (tm, tk) f32/bf16, w: (tk, tn) bf16 -> acc (tm, tn) f32
    @pl.when(pl.program_id(2) == 0)
    def _():
        acc_ref[...] = jnp.zeros_like(acc_ref)

    x = x_ref[...]
    if x.dtype != jnp.bfloat16:
        x = x.astype(jnp.bfloat16)      # in-kernel cast: free filler under MXU
    acc_ref[...] += jnp.dot(x, w_ref[...], preferred_element_type=jnp.float32)

    @pl.when(pl.program_id(2) == pl.num_programs(2) - 1)
    def _():
        o_ref[...] = acc_ref[...].astype(o_ref.dtype)


def _pad_axis(x, axis, multiple):
    pad = (-x.shape[axis]) % multiple
    if pad == 0:
        return x
    widths = [(0, 0)] * x.ndim
    widths[axis] = (0, pad)
    return jnp.pad(x, widths)


def linear_pallas(x2d, w_bf16, *, out_dtype=jnp.float32):
    """x2d: (M, Kin) f32/bf16, w_bf16: (Kin, N) bf16 (pre-cast once outside the
    jit) -> (M, N) out_dtype.  Tiled/pipelined over (M/tm, N/tn, K/tk) with the
    reduction axis last; bf16 MXU operands, f32 accumulation."""
    M, Kin = x2d.shape
    _, N = w_bf16.shape
    tm, tn, tk = _LINEAR_TILES
    # full extent for small dims (always legal), otherwise (8,128)-aligned tiles
    tm = M if M <= tm else tm
    tn = N if N <= tn else tn
    tk = Kin if Kin <= tk else tk
    # _pad_axis is a no-op (no extra HBM pass) when shapes already divide tiles
    xp = _pad_axis(_pad_axis(x2d, 0, tm), 1, tk)
    wp = _pad_axis(_pad_axis(w_bf16, 0, tk), 1, tn)
    Mp, Kp = xp.shape
    Np = wp.shape[1]

    xb = xp.dtype.itemsize
    ob = jnp.dtype(out_dtype).itemsize
    footprint = 2 * (tm * tk * xb + tk * tn * 2) + 2 * tm * tn * ob + tm * tn * 4
    vmem_limit = int(min(max(3 * footprint, 16 << 20), _VMEM_CAP))

    out = pl.pallas_call(
        _matmul_kernel,
        out_shape=jax.ShapeDtypeStruct((Mp, Np), out_dtype),
        grid=(Mp // tm, Np // tn, Kp // tk),
        in_specs=[pl.BlockSpec((tm, tk), lambda i, j, k: (i, k)),
                  pl.BlockSpec((tk, tn), lambda i, j, k: (k, j))],
        out_specs=pl.BlockSpec((tm, tn), lambda i, j, k: (i, j)),
        scratch_shapes=[pltpu.VMEM((tm, tn), jnp.float32)],
        compiler_params=pltpu.CompilerParams(
            dimension_semantics=("parallel", "parallel", "arbitrary"),
            vmem_limit_bytes=vmem_limit),
    )(xp, wp)
    if (Mp, Np) != (M, N):
        out = out[:M, :N]
    return out


# --------------------- grouped flash attention (per kv head) -------------------

def _make_flash_attn_kernel(GT, t_kv):
    NEG = -1e30  # finite mask value: no inf-inf NaNs for fully-masked kv tiles

    def kernel(limit_ref, q_ref, k_ref, v_ref, o_ref, m_sc, l_sc, acc_sc):
        # limit: (GT, 1) i32 causal row limit (= query_pos + T - t)
        # q: (GT, K) bf16 (rotary + 1/sqrt(K) already folded in)
        # k: (K, t_kv) bf16 (contraction dim leading)   v: (t_kv, V) bf16
        kv = pl.program_id(2)

        @pl.when(kv == 0)
        def _():
            m_sc[...] = jnp.full(m_sc.shape, NEG, jnp.float32)
            l_sc[...] = jnp.zeros_like(l_sc)
            acc_sc[...] = jnp.zeros_like(acc_sc)

        # one MXU matmul over all G query groups of this kv head
        s = jnp.dot(q_ref[...], k_ref[...],
                    preferred_element_type=jnp.float32)        # (GT, t_kv)

        k_pos = lax.broadcasted_iota(jnp.int32, (GT, t_kv), 1) + kv * t_kv
        mask = k_pos <= limit_ref[...]                          # causal (+T pad)
        s = jnp.where(mask, s, NEG)

        m_prev = m_sc[...]
        m_new = jnp.maximum(m_prev, jnp.max(s, axis=-1, keepdims=True))
        alpha = jnp.exp(m_prev - m_new)
        p = jnp.where(mask, jnp.exp(s - m_new), 0.0)
        l_sc[...] = alpha * l_sc[...] + jnp.sum(p, axis=-1, keepdims=True)
        acc_sc[...] = alpha * acc_sc[...] + jnp.dot(
            p.astype(v_ref.dtype), v_ref[...],
            preferred_element_type=jnp.float32)
        m_sc[...] = m_new

        @pl.when(kv == pl.num_programs(2) - 1)
        def _():
            # single lane-dense store per (b, h) grid step
            o_ref[...] = (acc_sc[...] *
                          pl.reciprocal(l_sc[...])).astype(o_ref.dtype)

    return kernel


def grouped_flash_attention(row_limit, q_in, k_in, v_in, *, t_kv):
    """row_limit: (G*t, 1) i32, q_in: (B, H, G*t, K) bf16,
    k_in: (B, H, K, Tp) bf16, v_in: (B, H, Tp, V) bf16  (Tp = n_kv * t_kv).
    Returns (B, H, G*t, V) bf16."""
    B, H, GT, K = q_in.shape
    V = v_in.shape[-1]
    Tp = k_in.shape[-1]
    assert Tp % t_kv == 0
    n_kv = Tp // t_kv

    blk_bytes = (2 * 2 * (GT * K + K * t_kv + t_kv * V + GT * V)
                 + 4 * (GT * V + 2 * GT) + 4 * GT)
    vmem_limit = int(min(max(4 * blk_bytes, 16 << 20), _VMEM_CAP))

    return pl.pallas_call(
        _make_flash_attn_kernel(GT, t_kv),
        grid=(B, H, n_kv),
        out_shape=jax.ShapeDtypeStruct((B, H, GT, V), jnp.bfloat16),
        in_specs=[
            pl.BlockSpec((GT, 1), lambda b, h, kv: (0, 0)),
            pl.BlockSpec((None, None, GT, K), lambda b, h, kv: (b, h, 0, 0)),
            pl.BlockSpec((None, None, K, t_kv), lambda b, h, kv: (b, h, 0, kv)),
            pl.BlockSpec((None, None, t_kv, V), lambda b, h, kv: (b, h, kv, 0)),
        ],
        out_specs=pl.BlockSpec((None, None, GT, V), lambda b, h, kv: (b, h, 0, 0)),
        scratch_shapes=[pltpu.VMEM((GT, 1), jnp.float32),
                        pltpu.VMEM((GT, 1), jnp.float32),
                        pltpu.VMEM((GT, V), jnp.float32)],
        compiler_params=pltpu.CompilerParams(
            dimension_semantics=("parallel", "parallel", "arbitrary"),
            vmem_limit_bytes=vmem_limit),
    )(row_limit, q_in, k_in, v_in)


# ------------------------------- JAX glue --------------------------------------

def rotary_tables(dim, seq_len, offset=0, base=10000):
    exps = -jnp.arange(0, dim, 2, dtype=jnp.float32) / dim
    thetas = jnp.power(float(base), exps)                     # (dim/2,)
    tpos = jnp.arange(offset, offset + seq_len, dtype=jnp.float32)
    ticks = jnp.outer(tpos, thetas)                           # (seq, dim/2)
    ticks = jnp.tile(ticks, (1, 2))                           # (seq, dim)
    return jnp.cos(ticks), jnp.sin(ticks)


def rotary_apply(x, cos, sin):
    """x: (B, t, H, Dh); cos/sin: (t, Dh). Matches RotaryEmbedding.forward."""
    c = cos[None, :, None, :]
    s = sin[None, :, None, :]
    x1, x2 = jnp.split(x, 2, axis=-1)
    neg_half = jnp.concatenate([-x2, x1], axis=-1)
    return x * c + neg_half * s


def init_params(key, emd_dim, num_q_heads, num_kv_heads, k_dim, v_dim):
    g = num_q_heads // num_kv_heads
    k1, k2, k3, k4 = jax.random.split(key, 4)
    return {
        "wq": 0.02 * jax.random.normal(k1, (emd_dim, k_dim * num_q_heads), jnp.float32),
        "wk": 0.02 * jax.random.normal(k2, (emd_dim, k_dim * num_kv_heads), jnp.float32),
        "wv": 0.02 * jax.random.normal(k3, (emd_dim, v_dim * num_kv_heads), jnp.float32),
        "wo": 0.02 * jax.random.normal(k4, (g * num_kv_heads * v_dim, emd_dim), jnp.float32),
    }


def prepare_params(params):
    """Cast projection weights to bf16 once, outside the per-token call path."""
    return {name: w.astype(jnp.bfloat16) for name, w in params.items()}


def multi_head_attention(params_bf16, q, k, v, *, num_q_heads, num_kv_heads,
                         k_dim, v_dim, kv_cache=None):
    """Pallas implementation of MultiHeadAttention.forward (bias=False, dropout=0)."""
    # TODO(synk): attn_dropout / resid_dropout > 0 not implemented (defaults are 0.0)
    B, t, D = q.shape
    H = num_kv_heads
    G = num_q_heads // num_kv_heads
    K, V = k_dim, v_dim
    offset = 0 if kv_cache is None else kv_cache.shape[1]

    # Fold the 1/sqrt(K) softmax temperature into the tiny q activations
    # (projection and rotary are linear, so the scale commutes).
    q_scaled = q * (1.0 / math.sqrt(float(K)))

    # projections (tiled bf16-MXU Pallas kernel, weights pre-cast to bf16)
    qh2d = linear_pallas(q_scaled.reshape(B * t, D), params_bf16["wq"])  # (B*t, G*H*K)
    kh2d = linear_pallas(k.reshape(B * t, D), params_bf16["wk"])         # (B*t, H*K)
    vh2d = linear_pallas(v.reshape(B * t, D), params_bf16["wv"])         # (B*t, H*V)

    cos, sin = rotary_tables(K, t, offset)                               # (t, K)

    # rotary applied full-width in the wrapper (tiny tensors) so the attention
    # kernel has no sub-lane slices / concatenates.
    qh = rotary_apply(qh2d.reshape(B, t, G * H, K), cos, sin)            # (B,t,G*H,K)
    kh = rotary_apply(kh2d.reshape(B, t, H, K), cos, sin)                # (B,t,H,K)
    vh = vh2d.reshape(B, t, H, V)                                        # (B,t,H,V)

    if kv_cache is not None:
        kh = jnp.concatenate([kv_cache[:, :, :, :K], kh], axis=1)
        vh = jnp.concatenate([kv_cache[:, :, :, K:], vh], axis=1)
        # TODO(synk): decode path should keep the K cache resident in
        # (B, H, K, T) layout and append new columns in place via
        # input_output_aliases instead of concatenating + transposing.
    T = kh.shape[1]

    # attention operand layouts (one kv head per grid step, kv tiled):
    #   q: (B, H, G*t, K)   k: (B, H, K, T)   v: (B, H, T, V), all bf16
    q_in = (qh.reshape(B, t, G, H, K).transpose(0, 3, 2, 1, 4)
              .reshape(B, H, G * t, K).astype(jnp.bfloat16))
    k_in = kh.transpose(0, 2, 3, 1).astype(jnp.bfloat16)
    v_in = vh.transpose(0, 2, 1, 3).astype(jnp.bfloat16)

    # kv tiling: whole T when small, 512-wide flash tiles (padded, masked) else
    t_kv = T if T <= 1024 else 512
    if T % t_kv:
        k_in = _pad_axis(k_in, 3, t_kv)
        v_in = _pad_axis(v_in, 2, t_kv)

    # causal row limit per (g, t) row: key_pos <= query_pos + (T - t)
    row_limit = (jnp.tile(jnp.arange(t, dtype=jnp.int32), (G,))
                 .reshape(G * t, 1) + (T - t))

    attn = grouped_flash_attention(row_limit, q_in, k_in, v_in, t_kv=t_kv)
    # (B, H, G*t, V) bf16 -> (B*t, G*H*V) in torch's (G, H, V) column order,
    # feeding wo directly without a wrapper-side cast.
    attn = (attn.reshape(B, H, G, t, V).transpose(0, 3, 2, 1, 4)
                .reshape(B * t, G * H * V))

    out = linear_pallas(attn, params_bf16["wo"]).reshape(B, t, D)

    new_kv_cache = jnp.concatenate([kh, vh], axis=-1)                    # (B,T,H,K+V)
    return out, new_kv_cache


# ------------------------------- reference --------------------------------------

def reference(params, q, k, v, *, num_q_heads, num_kv_heads, k_dim, v_dim):
    B, t, D = q.shape
    H = num_kv_heads
    G = num_q_heads // num_kv_heads
    qh = (q.reshape(B * t, D) @ params["wq"]).reshape(B, t, num_q_heads, k_dim)
    kh = (k.reshape(B * t, D) @ params["wk"]).reshape(B, t, H, k_dim)
    vh = (v.reshape(B * t, D) @ params["wv"]).reshape(B, t, H, v_dim)
    cos, sin = rotary_tables(k_dim, t, 0)
    qh = rotary_apply(qh, cos, sin)
    kh = rotary_apply(kh, cos, sin)
    gq = qh.reshape(B, t, G, H, k_dim)
    s = jnp.einsum('BtGHK,BTHK->BGHtT', gq, kh).astype(jnp.float32)
    T = kh.shape[1]
    mask = jnp.tril(jnp.ones((T, T), jnp.float32))[-t:, :].astype(bool)
    s = jnp.where(mask, s, -jnp.inf)
    p = jax.nn.softmax(s / math.sqrt(k_dim), axis=-1)
    o = jnp.einsum('BGHtT,BTHV->BtGHV', p, vh).reshape(B, t, G * H * v_dim)
    out = (o.reshape(B * t, -1) @ params["wo"]).reshape(B, t, D)
    return out, jnp.concatenate([kh, vh], axis=-1)


# --------------------------------- main ------------------------------------------

if __name__ == "__main__":
    B, t, D = 2, 8, 32
    num_q_heads, num_kv_heads = 4, 2
    k_dim, v_dim = 16, 16

    key = jax.random.PRNGKey(0)
    kp, kq, kk, kv = jax.random.split(key, 4)
    params = init_params(kp, D, num_q_heads, num_kv_heads, k_dim, v_dim)
    params_bf16 = prepare_params(params)     # one-time cast, outside the jit
    q = jax.random.normal(kq, (B, t, D), jnp.float32)
    k = jax.random.normal(kk, (B, t, D), jnp.float32)
    v = jax.random.normal(kv, (B, t, D), jnp.float32)

    fn = partial(multi_head_attention, num_q_heads=num_q_heads,
                 num_kv_heads=num_kv_heads, k_dim=k_dim, v_dim=v_dim)
    out, new_cache = jax.jit(fn)(params_bf16, q, k, v)
    jax.block_until_ready((out, new_cache))

    ref_out, ref_cache = reference(params, q, k, v, num_q_heads=num_q_heads,
                                   num_kv_heads=num_kv_heads, k_dim=k_dim, v_dim=v_dim)
    # bf16 MXU operands -> allow a few 1e-3 of slack
    np.testing.assert_allclose(np.asarray(out), np.asarray(ref_out), rtol=2e-2, atol=2e-2)
    np.testing.assert_allclose(np.asarray(new_cache), np.asarray(ref_cache), rtol=2e-2, atol=2e-2)

    assert out.shape == (B, t, D)
    assert new_cache.shape == (B, t, num_kv_heads, k_dim + v_dim)
    print("KERNEL_OK")
</pallas_src>

<mosaic_0001>
module attributes {stable_mosaic.version = 11 : i64} {
  func.func @_matmul_kernel(%arg0: i32, %arg1: i32, %arg2: i32, %arg3: memref<16x32xf32, #tpu.memory_space<vmem>>, %arg4: memref<32x64xbf16, #tpu.memory_space<vmem>>, %arg5: memref<16x64xf32, #tpu.memory_space<vmem>>, %arg6: memref<16x64xf32, #tpu.memory_space<vmem>>) attributes {dimension_semantics = [#tpu.dimension_semantics<parallel>, #tpu.dimension_semantics<parallel>, #tpu.dimension_semantics<arbitrary>], iteration_bounds = array<i64: 1, 1, 1>, scalar_prefetch = 0 : i64, scratch_operands = 1 : i64, tpu.core_type = #tpu.core_type<tc>, window_params = [{transform_indices = @transform_0, window_bounds = array<i64: 16, 32>}, {transform_indices = @transform_1, window_bounds = array<i64: 32, 64>}, {transform_indices = @transform_2, window_bounds = array<i64: 16, 64>}]} {
    %c0_i32 = arith.constant 0 : i32
    %0 = arith.cmpi eq, %arg2, %c0_i32 : i32
    %1 = arith.extui %0 : i1 to i32
    %c0_i32_0 = arith.constant 0 : i32
    %2 = arith.cmpi ne, %1, %c0_i32_0 : i32
    scf.if %2 {
      %cst_10 = arith.constant 0.000000e+00 : f32
      %13 = vector.broadcast %cst_10 : f32 to vector<16x64xf32>
      %c0_11 = arith.constant 0 : index
      %c0_12 = arith.constant 0 : index
      %14 = vector.load %arg6[%c0_11, %c0_12] : memref<16x64xf32, #tpu.memory_space<vmem>>, vector<16x64xf32>
      tpu.vector_store %arg6[%c0_11, %c0_12], %13 {strides = array<i32>} : memref<16x64xf32, #tpu.memory_space<vmem>>, vector<16x64xf32>,
    } else {
    }
    %c0 = arith.constant 0 : index
    %c0_1 = arith.constant 0 : index
    %3 = vector.load %arg3[%c0, %c0_1] : memref<16x32xf32, #tpu.memory_space<vmem>>, vector<16x32xf32>
    %4 = arith.truncf %3 : vector<16x32xf32> to vector<16x32xbf16>
    %c0_2 = arith.constant 0 : index
    %c0_3 = arith.constant 0 : index
    %5 = vector.load %arg6[%c0_2, %c0_3] : memref<16x64xf32, #tpu.memory_space<vmem>>, vector<16x64xf32>
    %c0_4 = arith.constant 0 : index
    %c0_5 = arith.constant 0 : index
    %6 = vector.load %arg4[%c0_4, %c0_5] : memref<32x64xbf16, #tpu.memory_space<vmem>>, vector<32x64xbf16>
    %cst = arith.constant dense<0.000000e+00> : vector<16x64xf32>
    %7 = tpu.matmul %4, %6, %cst {dimension_numbers = #tpu.dot_dimension_numbers<[1], [0], [0], [1], [0, 0, 1, 1], [], []>} : vector<16x32xbf16>, vector<32x64xbf16>, vector<16x64xf32> -> vector<16x64xf32>
    %8 = arith.addf %5, %7 : vector<16x64xf32>
    %c0_6 = arith.constant 0 : index
    %c0_7 = arith.constant 0 : index
    %9 = vector.load %arg6[%c0_6, %c0_7] : memref<16x64xf32, #tpu.memory_space<vmem>>, vector<16x64xf32>
    tpu.vector_store %arg6[%c0_6, %c0_7], %8 {strides = array<i32>} : memref<16x64xf32, #tpu.memory_space<vmem>>, vector<16x64xf32>,
    %c0_i32_8 = arith.constant 0 : i32
    %10 = arith.cmpi eq, %arg2, %c0_i32_8 : i32
    %11 = arith.extui %10 : i1 to i32
    %c0_i32_9 = arith.constant 0 : i32
    %12 = arith.cmpi ne, %11, %c0_i32_9 : i32
    scf.if %12 {
      %c0_10 = arith.constant 0 : index
      %c0_11 = arith.constant 0 : index
      %13 = vector.load %arg6[%c0_10, %c0_11] : memref<16x64xf32, #tpu.memory_space<vmem>>, vector<16x64xf32>
      %c0_12 = arith.constant 0 : index
      %c0_13 = arith.constant 0 : index
      %14 = vector.load %arg5[%c0_12, %c0_13] : memref<16x64xf32, #tpu.memory_space<vmem>>, vector<16x64xf32>
      tpu.vector_store %arg5[%c0_12, %c0_13], %13 {strides = array<i32>} : memref<16x64xf32, #tpu.memory_space<vmem>>, vector<16x64xf32>,
    } else {
    }
    return
  }
  func.func @transform_0(%arg0: i32, %arg1: i32, %arg2: i32) -> (i32, i32) {
    %c0_i32 = arith.constant 0 : i32
    return %arg0, %arg2 : i32, i32
  }
  func.func @transform_1(%arg0: i32, %arg1: i32, %arg2: i32) -> (i32, i32) {
    %c0_i32 = arith.constant 0 : i32
    return %arg2, %arg1 : i32, i32
  }
  func.func @transform_2(%arg0: i32, %arg1: i32, %arg2: i32) -> (i32, i32) {
    %c0_i32 = arith.constant 0 : i32
    return %arg0, %arg1 : i32, i32
  }
}

module attributes {stable_mosaic.version = 11 : i64} {
  func.func @_matmul_kernel(%arg0: i32, %arg1: i32, %arg2: i32, %arg3: memref<16x32xf32, #tpu.memory_space<vmem>>, %arg4: memref<32x32xbf16, #tpu.memory_space<vmem>>, %arg5: memref<16x32xf32, #tpu.memory_space<vmem>>, %arg6: memref<16x32xf32, #tpu.memory_space<vmem>>) attributes {dimension_semantics = [#tpu.dimension_semantics<parallel>, #tpu.dimension_semantics<parallel>, #tpu.dimension_semantics<arbitrary>], iteration_bounds = array<i64: 1, 1, 1>, scalar_prefetch = 0 : i64, scratch_operands = 1 : i64, tpu.core_type = #tpu.core_type<tc>, window_params = [{transform_indices = @transform_0, window_bounds = array<i64: 16, 32>}, {transform_indices = @transform_1, window_bounds = array<i64: 32, 32>}, {transform_indices = @transform_2, window_bounds = array<i64: 16, 32>}]} {
    %c0_i32 = arith.constant 0 : i32
    %0 = arith.cmpi eq, %arg2, %c0_i32 : i32
    %1 = arith.extui %0 : i1 to i32
    %c0_i32_0 = arith.constant 0 : i32
    %2 = arith.cmpi ne, %1, %c0_i32_0 : i32
    scf.if %2 {
      %cst_10 = arith.constant 0.000000e+00 : f32
      %13 = vector.broadcast %cst_10 : f32 to vector<16x32xf32>
      %c0_11 = arith.constant 0 : index
      %c0_12 = arith.constant 0 : index
      %14 = vector.load %arg6[%c0_11, %c0_12] : memref<16x32xf32, #tpu.memory_space<vmem>>, vector<16x32xf32>
      tpu.vector_store %arg6[%c0_11, %c0_12], %13 {strides = array<i32>} : memref<16x32xf32, #tpu.memory_space<vmem>>, vector<16x32xf32>,
    } else {
    }
    %c0 = arith.constant 0 : index
    %c0_1 = arith.constant 0 : index
    %3 = vector.load %arg3[%c0, %c0_1] : memref<16x32xf32, #tpu.memory_space<vmem>>, vector<16x32xf32>
    %4 = arith.truncf %3 : vector<16x32xf32> to vector<16x32xbf16>
    %c0_2 = arith.constant 0 : index
    %c0_3 = arith.constant 0 : index
    %5 = vector.load %arg6[%c0_2, %c0_3] : memref<16x32xf32, #tpu.memory_space<vmem>>, vector<16x32xf32>
    %c0_4 = arith.constant 0 : index
    %c0_5 = arith.constant 0 : index
    %6 = vector.load %arg4[%c0_4, %c0_5] : memref<32x32xbf16, #tpu.memory_space<vmem>>, vector<32x32xbf16>
    %cst = arith.constant dense<0.000000e+00> : vector<16x32xf32>
    %7 = tpu.matmul %4, %6, %cst {dimension_numbers = #tpu.dot_dimension_numbers<[1], [0], [0], [1], [0, 0, 1, 1], [], []>} : vector<16x32xbf16>, vector<32x32xbf16>, vector<16x32xf32> -> vector<16x32xf32>
    %8 = arith.addf %5, %7 : vector<16x32xf32>
    %c0_6 = arith.constant 0 : index
    %c0_7 = arith.constant 0 : index
    %9 = vector.load %arg6[%c0_6, %c0_7] : memref<16x32xf32, #tpu.memory_space<vmem>>, vector<16x32xf32>
    tpu.vector_store %arg6[%c0_6, %c0_7], %8 {strides = array<i32>} : memref<16x32xf32, #tpu.memory_space<vmem>>, vector<16x32xf32>,
    %c0_i32_8 = arith.constant 0 : i32
    %10 = arith.cmpi eq, %arg2, %c0_i32_8 : i32
    %11 = arith.extui %10 : i1 to i32
    %c0_i32_9 = arith.constant 0 : i32
    %12 = arith.cmpi ne, %11, %c0_i32_9 : i32
    scf.if %12 {
      %c0_10 = arith.constant 0 : index
      %c0_11 = arith.constant 0 : index
      %13 = vector.load %arg6[%c0_10, %c0_11] : memref<16x32xf32, #tpu.memory_space<vmem>>, vector<16x32xf32>
      %c0_12 = arith.constant 0 : index
      %c0_13 = arith.constant 0 : index
      %14 = vector.load %arg5[%c0_12, %c0_13] : memref<16x32xf32, #tpu.memory_space<vmem>>, vector<16x32xf32>
      tpu.vector_store %arg5[%c0_12, %c0_13], %13 {strides = array<i32>} : memref<16x32xf32, #tpu.memory_space<vmem>>, vector<16x32xf32>,
    } else {
    }
    return
  }
  func.func @transform_0(%arg0: i32, %arg1: i32, %arg2: i32) -> (i32, i32) {
    %c0_i32 = arith.constant 0 : i32
    return %arg0, %arg2 : i32, i32
  }
  func.func @transform_1(%arg0: i32, %arg1: i32, %arg2: i32) -> (i32, i32) {
    %c0_i32 = arith.constant 0 : i32
    return %arg2, %arg1 : i32, i32
  }
  func.func @transform_2(%arg0: i32, %arg1: i32, %arg2: i32) -> (i32, i32) {
    %c0_i32 = arith.constant 0 : i32
    return %arg0, %arg1 : i32, i32
  }
}

module attributes {stable_mosaic.version = 11 : i64} {
  func.func @kernel(%arg0: i32, %arg1: i32, %arg2: i32, %arg3: memref<16x1xi32, #tpu.memory_space<vmem>>, %arg4: memref<1x1x16x16xbf16, #tpu.memory_space<vmem>>, %arg5: memref<1x1x16x8xbf16, #tpu.memory_space<vmem>>, %arg6: memref<1x1x8x16xbf16, #tpu.memory_space<vmem>>, %arg7: memref<1x1x16x16xbf16, #tpu.memory_space<vmem>>, %arg8: memref<16x1xf32, #tpu.memory_space<vmem>>, %arg9: memref<16x1xf32, #tpu.memory_space<vmem>>, %arg10: memref<16x16xf32, #tpu.memory_space<vmem>>) attributes {dimension_semantics = [#tpu.dimension_semantics<parallel>, #tpu.dimension_semantics<parallel>, #tpu.dimension_semantics<arbitrary>], iteration_bounds = array<i64: 2, 2, 1>, scalar_prefetch = 0 : i64, scratch_operands = 3 : i64, tpu.core_type = #tpu.core_type<tc>, window_params = [{pipeline_mode = #tpu.pipeline_mode<synchronous>, transform_indices = @transform_0, window_bounds = array<i64: 16, 1>}, {transform_indices = @transform_1, window_bounds = array<i64: 1, 1, 16, 16>}, {transform_indices = @transform_2, window_bounds = array<i64: 1, 1, 16, 8>}, {transform_indices = @transform_3, window_bounds = array<i64: 1, 1, 8, 16>}, {transform_indices = @transform_4, window_bounds = array<i64: 1, 1, 16, 16>}]} {
    %c0_i32 = arith.constant 0 : i32
    %0 = arith.cmpi eq, %arg2, %c0_i32 : i32
    %1 = arith.extui %0 : i1 to i32
    %c0_i32_0 = arith.constant 0 : i32
    %2 = arith.cmpi ne, %1, %c0_i32_0 : i32
    scf.if %2 {
      %cst_33 = arith.constant -1.000000e+30 : f32
      %47 = vector.broadcast %cst_33 : f32 to vector<16x1xf32>
      %c0_34 = arith.constant 0 : index
      %c0_35 = arith.constant 0 : index
      %48 = vector.load %arg8[%c0_34, %c0_35] : memref<16x1xf32, #tpu.memory_space<vmem>>, vector<16x1xf32>
      tpu.vector_store %arg8[%c0_34, %c0_35], %47 {strides = array<i32>} : memref<16x1xf32, #tpu.memory_space<vmem>>, vector<16x1xf32>,
      %cst_36 = arith.constant 0.000000e+00 : f32
      %49 = vector.broadcast %cst_36 : f32 to vector<16x1xf32>
      %c0_37 = arith.constant 0 : index
      %c0_38 = arith.constant 0 : index
      %50 = vector.load %arg9[%c0_37, %c0_38] : memref<16x1xf32, #tpu.memory_space<vmem>>, vector<16x1xf32>
      tpu.vector_store %arg9[%c0_37, %c0_38], %49 {strides = array<i32>} : memref<16x1xf32, #tpu.memory_space<vmem>>, vector<16x1xf32>,
      %cst_39 = arith.constant 0.000000e+00 : f32
      %51 = vector.broadcast %cst_39 : f32 to vector<16x16xf32>
      %c0_40 = arith.constant 0 : index
      %c0_41 = arith.constant 0 : index
      %52 = vector.load %arg10[%c0_40, %c0_41] : memref<16x16xf32, #tpu.memory_space<vmem>>, vector<16x16xf32>
      tpu.vector_store %arg10[%c0_40, %c0_41], %51 {strides = array<i32>} : memref<16x16xf32, #tpu.memory_space<vmem>>, vector<16x16xf32>,
    } else {
    }
    %c0 = arith.constant 0 : index
    %c0_1 = arith.constant 0 : index
    %c0_2 = arith.constant 0 : index
    %c0_3 = arith.constant 0 : index
    %3 = vector.load %arg4[%c0, %c0_1, %c0_2, %c0_3] : memref<1x1x16x16xbf16, #tpu.memory_space<vmem>>, vector<1x1x16x16xbf16>
    %4 = vector.shape_cast %3 : vector<1x1x16x16xbf16> to vector<16x16xbf16>
    %c0_4 = arith.constant 0 : index
    %c0_5 = arith.constant 0 : index
    %c0_6 = arith.constant 0 : index
    %c0_7 = arith.constant 0 : index
    %5 = vector.load %arg5[%c0_4, %c0_5, %c0_6, %c0_7] : memref<1x1x16x8xbf16, #tpu.memory_space<vmem>>, vector<1x1x16x8xbf16>
    %6 = vector.shape_cast %5 : vector<1x1x16x8xbf16> to vector<16x8xbf16>
    %cst = arith.constant dense<0.000000e+00> : vector<16x8xf32>
    %7 = tpu.matmul %4, %6, %cst {dimension_numbers = #tpu.dot_dimension_numbers<[1], [0], [0], [1], [0, 0, 1, 1], [], []>} : vector<16x16xbf16>, vector<16x8xbf16>, vector<16x8xf32> -> vector<16x8xf32>
    %8 = tpu.iota {dimensions = array<i32: 1>} : vector<16x8xi32>
    %c8_i32 = arith.constant 8 : i32
    %9 = arith.muli %arg2, %c8_i32 : i32
    %10 = vector.broadcast %9 : i32 to vector<16x8xi32>
    %11 = arith.addi %8, %10 : vector<16x8xi32>
    %c0_8 = arith.constant 0 : index
    %c0_9 = arith.constant 0 : index
    %12 = vector.load %arg3[%c0_8, %c0_9] : memref<16x1xi32, #tpu.memory_space<vmem>>, vector<16x1xi32>
    %13 = vector.broadcast %12 : vector<16x1xi32> to vector<16x8xi32>
    %14 = arith.cmpi sle, %11, %13 : vector<16x8xi32>
    %cst_10 = arith.constant -1.000000e+30 : f32
    %15 = vector.broadcast %cst_10 : f32 to vector<16x8xf32>
    %16 = arith.select %14, %7, %15 : vector<16x8xi1>, vector<16x8xf32>
    %c0_11 = arith.constant 0 : index
    %c0_12 = arith.constant 0 : index
    %17 = vector.load %arg8[%c0_11, %c0_12] : memref<16x1xf32, #tpu.memory_space<vmem>>, vector<16x1xf32>
    %cst_13 = arith.constant dense<0xFF800000> : vector<16xf32>
    %18 = vector.multi_reduction <maximumf>, %16, %cst_13 [1] : vector<16x8xf32> to vector<16xf32>
    %19 = vector.shape_cast %18 : vector<16xf32> to vector<16x1xf32>
    %20 = arith.maximumf %17, %19 : vector<16x1xf32>
    %21 = arith.subf %17, %20 : vector<16x1xf32>
    %22 = math.exp %21 : vector<16x1xf32>
    %23 = vector.broadcast %20 : vector<16x1xf32> to vector<16x8xf32>
    %24 = arith.subf %16, %23 : vector<16x8xf32>
    %25 = math.exp %24 : vector<16x8xf32>
    %cst_14 = arith.constant 0.000000e+00 : f32
    %26 = vector.broadcast %cst_14 : f32 to vector<16x8xf32>
    %27 = arith.select %14, %25, %26 : vector<16x8xi1>, vector<16x8xf32>
    %c0_15 = arith.constant 0 : index
    %c0_16 = arith.constant 0 : index
    %28 = vector.load %arg9[%c0_15, %c0_16] : memref<16x1xf32, #tpu.memory_space<vmem>>, vector<16x1xf32>
    %29 = arith.mulf %22, %28 : vector<16x1xf32>
    %cst_17 = arith.constant dense<0.000000e+00> : vector<16xf32>
    %30 = vector.multi_reduction <add>, %27, %cst_17 [1] : vector<16x8xf32> to vector<16xf32>
    %31 = vector.shape_cast %30 : vector<16xf32> to vector<16x1xf32>
    %32 = arith.addf %29, %31 : vector<16x1xf32>
    %c0_18 = arith.constant 0 : index
    %c0_19 = arith.constant 0 : index
    %33 = vector.load %arg9[%c0_18, %c0_19] : memref<16x1xf32, #tpu.memory_space<vmem>>, vector<16x1xf32>
    tpu.vector_store %arg9[%c0_18, %c0_19], %32 {strides = array<i32>} : memref<16x1xf32, #tpu.memory_space<vmem>>, vector<16x1xf32>,
    %c0_20 = arith.constant 0 : index
    %c0_21 = arith.constant 0 : index
    %34 = vector.load %arg10[%c0_20, %c0_21] : memref<16x16xf32, #tpu.memory_space<vmem>>, vector<16x16xf32>
    %35 = vector.broadcast %22 : vector<16x1xf32> to vector<16x16xf32>
    %36 = arith.mulf %35, %34 : vector<16x16xf32>
    %37 = arith.truncf %27 : vector<16x8xf32> to vector<16x8xbf16>
    %c0_22 = arith.constant 0 : index
    %c0_23 = arith.constant 0 : index
    %c0_24 = arith.constant 0 : index
    %c0_25 = arith.constant 0 : index
    %38 = vector.load %arg6[%c0_22, %c0_23, %c0_24, %c0_25] : memref<1x1x8x16xbf16, #tpu.memory_space<vmem>>, vector<1x1x8x16xbf16>
    %39 = vector.shape_cast %38 : vector<1x1x8x16xbf16> to vector<8x16xbf16>
    %cst_26 = arith.constant dense<0.000000e+00> : vector<16x16xf32>
    %40 = tpu.matmul %37, %39, %cst_26 {dimension_numbers = #tpu.dot_dimension_numbers<[1], [0], [0], [1], [0, 0, 1, 1], [], []>} : vector<16x8xbf16>, vector<8x16xbf16>, vector<16x16xf32> -> vector<16x16xf32>
    %41 = arith.addf %36, %40 : vector<16x16xf32>
    %c0_27 = arith.constant 0 : index
    %c0_28 = arith.constant 0 : index
    %42 = vector.load %arg10[%c0_27, %c0_28] : memref<16x16xf32, #tpu.memory_space<vmem>>, vector<16x16xf32>
    tpu.vector_store %arg10[%c0_27, %c0_28], %41 {strides = array<i32>} : memref<16x16xf32, #tpu.memory_space<vmem>>, vector<16x16xf32>,
    %c0_29 = arith.constant 0 : index
    %c0_30 = arith.constant 0 : index
    %43 = vector.load %arg8[%c0_29, %c0_30] : memref<16x1xf32, #tpu.memory_space<vmem>>, vector<16x1xf32>
    tpu.vector_store %arg8[%c0_29, %c0_30], %20 {strides = array<i32>} : memref<16x1xf32, #tpu.memory_space<vmem>>, vector<16x1xf32>,
    %c0_i32_31 = arith.constant 0 : i32
    %44 = arith.cmpi eq, %arg2, %c0_i32_31 : i32
    %45 = arith.extui %44 : i1 to i32
    %c0_i32_32 = arith.constant 0 : i32
    %46 = arith.cmpi ne, %45, %c0_i32_32 : i32
    scf.if %46 {
      %c0_33 = arith.constant 0 : index
      %c0_34 = arith.constant 0 : index
      %47 = vector.load %arg10[%c0_33, %c0_34] : memref<16x16xf32, #tpu.memory_space<vmem>>, vector<16x16xf32>
      %c0_35 = arith.constant 0 : index
      %c0_36 = arith.constant 0 : index
      %48 = vector.load %arg9[%c0_35, %c0_36] : memref<16x1xf32, #tpu.memory_space<vmem>>, vector<16x1xf32>
      %49 = tpu.reciprocal %48 : vector<16x1xf32> -> vector<16x1xf32>
      %50 = vector.broadcast %49 : vector<16x1xf32> to vector<16x16xf32>
      %51 = arith.mulf %47, %50 : vector<16x16xf32>
      %52 = arith.truncf %51 : vector<16x16xf32> to vector<16x16xbf16>
      %c0_37 = arith.constant 0 : index
      %c0_38 = arith.constant 0 : index
      %c0_39 = arith.constant 0 : index
      %c0_40 = arith.constant 0 : index
      %53 = vector.load %arg7[%c0_37, %c0_38, %c0_39, %c0_40] : memref<1x1x16x16xbf16, #tpu.memory_space<vmem>>, vector<1x1x16x16xbf16>
      %54 = vector.shape_cast %53 : vector<1x1x16x16xbf16> to vector<16x16xbf16>
      %55 = vector.shape_cast %52 : vector<16x16xbf16> to vector<1x1x16x16xbf16>
      tpu.vector_store %arg7[%c0_37, %c0_38, %c0_39, %c0_40], %55 {strides = array<i32>} : memref<1x1x16x16xbf16, #tpu.memory_space<vmem>>, vector<1x1x16x16xbf16>,
    } else {
    }
    return
  }
  func.func @transform_0(%arg0: i32, %arg1: i32, %arg2: i32) -> (i32, i32) {
    %c0_i32 = arith.constant 0 : i32
    %c0_i32_0 = arith.constant 0 : i32
    %c0_i32_1 = arith.constant 0 : i32
    return %c0_i32, %c0_i32_0 : i32, i32
  }
  func.func @transform_1(%arg0: i32, %arg1: i32, %arg2: i32) -> (i32, i32, i32, i32) {
    %c0_i32 = arith.constant 0 : i32
    %c0_i32_0 = arith.constant 0 : i32
    %c0_i32_1 = arith.constant 0 : i32
    return %arg0, %arg1, %c0_i32, %c0_i32_0 : i32, i32, i32, i32
  }
  func.func @transform_2(%arg0: i32, %arg1: i32, %arg2: i32) -> (i32, i32, i32, i32) {
    %c0_i32 = arith.constant 0 : i32
    %c0_i32_0 = arith.constant 0 : i32
    return %arg0, %arg1, %c0_i32, %arg2 : i32, i32, i32, i32
  }
  func.func @transform_3(%arg0: i32, %arg1: i32, %arg2: i32) -> (i32, i32, i32, i32) {
    %c0_i32 = arith.constant 0 : i32
    %c0_i32_0 = arith.constant 0 : i32
    return %arg0, %arg1, %arg2, %c0_i32 : i32, i32, i32, i32
  }
  func.func @transform_4(%arg0: i32, %arg1: i32, %arg2: i32) -> (i32, i32, i32, i32) {
    %c0_i32 = arith.constant 0 : i32
    %c0_i32_0 = arith.constant 0 : i32
    %c0_i32_1 = arith.constant 0 : i32
    return %arg0, %arg1, %c0_i32, %c0_i32_0 : i32, i32, i32, i32
  }
}

module attributes {stable_mosaic.version = 11 : i64} {
  func.func @_matmul_kernel(%arg0: i32, %arg1: i32, %arg2: i32, %arg3: memref<16x64xbf16, #tpu.memory_space<vmem>>, %arg4: memref<64x32xbf16, #tpu.memory_space<vmem>>, %arg5: memref<16x32xf32, #tpu.memory_space<vmem>>, %arg6: memref<16x32xf32, #tpu.memory_space<vmem>>) attributes {dimension_semantics = [#tpu.dimension_semantics<parallel>, #tpu.dimension_semantics<parallel>, #tpu.dimension_semantics<arbitrary>], iteration_bounds = array<i64: 1, 1, 1>, scalar_prefetch = 0 : i64, scratch_operands = 1 : i64, tpu.core_type = #tpu.core_type<tc>, window_params = [{transform_indices = @transform_0, window_bounds = array<i64: 16, 64>}, {transform_indices = @transform_1, window_bounds = array<i64: 64, 32>}, {transform_indices = @transform_2, window_bounds = array<i64: 16, 32>}]} {
    %c0_i32 = arith.constant 0 : i32
    %0 = arith.cmpi eq, %arg2, %c0_i32 : i32
    %1 = arith.extui %0 : i1 to i32
    %c0_i32_0 = arith.constant 0 : i32
    %2 = arith.cmpi ne, %1, %c0_i32_0 : i32
    scf.if %2 {
      %cst_10 = arith.constant 0.000000e+00 : f32
      %12 = vector.broadcast %cst_10 : f32 to vector<16x32xf32>
      %c0_11 = arith.constant 0 : index
      %c0_12 = arith.constant 0 : index
      %13 = vector.load %arg6[%c0_11, %c0_12] : memref<16x32xf32, #tpu.memory_space<vmem>>, vector<16x32xf32>
      tpu.vector_store %arg6[%c0_11, %c0_12], %12 {strides = array<i32>} : memref<16x32xf32, #tpu.memory_space<vmem>>, vector<16x32xf32>,
    } else {
    }
    %c0 = arith.constant 0 : index
    %c0_1 = arith.constant 0 : index
    %3 = vector.load %arg3[%c0, %c0_1] : memref<16x64xbf16, #tpu.memory_space<vmem>>, vector<16x64xbf16>
    %c0_2 = arith.constant 0 : index
    %c0_3 = arith.constant 0 : index
    %4 = vector.load %arg6[%c0_2, %c0_3] : memref<16x32xf32, #tpu.memory_space<vmem>>, vector<16x32xf32>
    %c0_4 = arith.constant 0 : index
    %c0_5 = arith.constant 0 : index
    %5 = vector.load %arg4[%c0_4, %c0_5] : memref<64x32xbf16, #tpu.memory_space<vmem>>, vector<64x32xbf16>
    %cst = arith.constant dense<0.000000e+00> : vector<16x32xf32>
    %6 = tpu.matmul %3, %5, %cst {dimension_numbers = #tpu.dot_dimension_numbers<[1], [0], [0], [1], [0, 0, 1, 1], [], []>} : vector<16x64xbf16>, vector<64x32xbf16>, vector<16x32xf32> -> vector<16x32xf32>
    %7 = arith.addf %4, %6 : vector<16x32xf32>
    %c0_6 = arith.constant 0 : index
    %c0_7 = arith.constant 0 : index
    %8 = vector.load %arg6[%c0_6, %c0_7] : memref<16x32xf32, #tpu.memory_space<vmem>>, vector<16x32xf32>
    tpu.vector_store %arg6[%c0_6, %c0_7], %7 {strides = array<i32>} : memref<16x32xf32, #tpu.memory_space<vmem>>, vector<16x32xf32>,
    %c0_i32_8 = arith.constant 0 : i32
    %9 = arith.cmpi eq, %arg2, %c0_i32_8 : i32
    %10 = arith.extui %9 : i1 to i32
    %c0_i32_9 = arith.constant 0 : i32
    %11 = arith.cmpi ne, %10, %c0_i32_9 : i32
    scf.if %11 {
      %c0_10 = arith.constant 0 : index
      %c0_11 = arith.constant 0 : index
      %12 = vector.load %arg6[%c0_10, %c0_11] : memref<16x32xf32, #tpu.memory_space<vmem>>, vector<16x32xf32>
      %c0_12 = arith.constant 0 : index
      %c0_13 = arith.constant 0 : index
      %13 = vector.load %arg5[%c0_12, %c0_13] : memref<16x32xf32, #tpu.memory_space<vmem>>, vector<16x32xf32>
      tpu.vector_store %arg5[%c0_12, %c0_13], %12 {strides = array<i32>} : memref<16x32xf32, #tpu.memory_space<vmem>>, vector<16x32xf32>,
    } else {
    }
    return
  }
  func.func @transform_0(%arg0: i32, %arg1: i32, %arg2: i32) -> (i32, i32) {
    %c0_i32 = arith.constant 0 : i32
    return %arg0, %arg2 : i32, i32
  }
  func.func @transform_1(%arg0: i32, %arg1: i32, %arg2: i32) -> (i32, i32) {
    %c0_i32 = arith.constant 0 : i32
    return %arg2, %arg1 : i32, i32
  }
  func.func @transform_2(%arg0: i32, %arg1: i32, %arg2: i32) -> (i32, i32) {
    %c0_i32 = arith.constant 0 : i32
    return %arg0, %arg1 : i32, i32
  }
}

</mosaic_0001>

<llo_original>
// kernel: tile.0
$region0: #{tile.0}
  %s0 = inlined_call_operand.vmem [shape: s32[2,8], index: 0, kind: input, shape index: {}]
  %s1 = inlined_call_operand.vmem [shape: s32[16,1], index: 1, kind: output, shape index: {}]
  $region1: #{tile.0} parent=0
    #allocation0 [shape = 'u8[4096]{0}', space=vmem, size = 0x1000, scoped, tag = 'scoped mem for input reshape']
    %s3 = sshllo.u32 0, 2
    %v4 = vld [vmem:[%s0] sm:%s3]
    %5 = vst [vmem:[#allocation0] sm:%s3] %v4
    %v6 = vld [vmem:[#allocation0] sm:$0x3]
    %vm7 = vcmask 7168
    %8 = vst.msk [vmem:[%s1] ss:$8 sm:$0x3] %vm7, %v6
    %v9 = vld [vmem:[#allocation0] sm:$0x3]
    %10 = vrot.lane.b32.xlu0 %v9, 127
    %v11 = vpop.permute.xlu0 %10
    %vm12 = vcmask 7168
    %s13 = scalar_lea.vmem %s1, 1
    %14 = vst.msk [vmem:[%s13] ss:$8 sm:$0x3] %vm12, %v11
    %v15 = vld [vmem:[#allocation0] sm:$0x3]
    %16 = vrot.lane.b32.xlu0 %v15, 126
    %v17 = vpop.permute.xlu0 %16
    %vm18 = vcmask 7168
    %s19 = scalar_lea.vmem %s1, 2
    %20 = vst.msk [vmem:[%s19] ss:$8 sm:$0x3] %vm18, %v17
    %v21 = vld [vmem:[#allocation0] sm:$0x3]
    %22 = vrot.lane.b32.xlu0 %v21, 125
    %v23 = vpop.permute.xlu0 %22
    %vm24 = vcmask 7168
    %s25 = scalar_lea.vmem %s1, 3
    %26 = vst.msk [vmem:[%s25] ss:$8 sm:$0x3] %vm24, %v23
    %v27 = vld [vmem:[#allocation0] sm:$0x3]
    %28 = vrot.lane.b32.xlu0 %v27, 124
    %v29 = vpop.permute.xlu0 %28
    %vm30 = vcmask 7168
    %s31 = scalar_lea.vmem %s1, 4
    %32 = vst.msk [vmem:[%s31] ss:$8 sm:$0x3] %vm30, %v29
    %v33 = vld [vmem:[#allocation0] sm:$0x3]
    %34 = vrot.lane.b32.xlu0 %v33, 123
    %v35 = vpop.permute.xlu0 %34
    %vm36 = vcmask 7168
    %s37 = scalar_lea.vmem %s1, 5
    %38 = vst.msk [vmem:[%s37] ss:$8 sm:$0x3] %vm36, %v35
    %v39 = vld [vmem:[#allocation0] sm:$0x3]
    %40 = vrot.lane.b32.xlu0 %v39, 122
    %v41 = vpop.permute.xlu0 %40
    %vm42 = vcmask 7168
    %s43 = scalar_lea.vmem %s1, 6
    %44 = vst.msk [vmem:[%s43] ss:$8 sm:$0x3] %vm42, %v41
    %v45 = vld [vmem:[#allocation0] sm:$0x3]
    %46 = vrot.lane.b32.xlu0 %v45, 121
    %v47 = vpop.permute.xlu0 %46
    %vm48 = vcmask 7168
    %s49 = scalar_lea.vmem %s1, 7
    %50 = vst.msk [vmem:[%s49] ss:$8 sm:$0x3] %vm48, %v47

// kernel: multi_head_attention.5
$region0: #{multi_head_attention.5}
  #allocation0 [shape = 'u32[]', space=smem, size = 0x4, offset = 0x4, fixed_abs, tag = 'smem constant byte address 0x4 - core index']
  #allocation1 [shape = 'u32[144,128]{1,0:T(1,128)}', space=vmem, size = 0x12000, scoped, tag = 'internal scratch']
  #allocation2 [shape = 'f32[16,64]{1,0:T(8,128)}', space=vmem, size = 0x2000, scoped, tag = 'scratch operand']
  %s0 = inlined_call_operand.vmem [shape: f32[16,32], index: 0, kind: input, shape index: {}]
  %s1 = inlined_call_operand.vmem [shape: bf16[32,64], index: 1, kind: input, shape index: {}]
  %s2 = inlined_call_operand.vmem [shape: f32[16,64], index: 2, kind: output, shape index: {}]
  %s3 = sld [smem:[#allocation0]]
  $region26: #{multi_head_attention.5} parent=0
    _
  %s5 = ssub.s32 1, %s3
  %s6 = scalar_select 0, %s5, %s3
  // Predicated region
  $region2: #{multi_head_attention.5} parent=0 // pred_check
    _
  $region3: #{multi_head_attention.5} parent=0 // pred_check_branch
    %8 = sbr.rel (0) target = $region5
  $region4: #{multi_head_attention.5} parent=0 // pred_region
    _
  $region5: #{multi_head_attention.5} parent=0 // pred_fallthru
    _
  // Predicated region
  $region6: #{multi_head_attention.5} parent=0 // pred_check
    _
  $region7: #{multi_head_attention.5} parent=0 // pred_check_branch
    %10 = sbr.rel (0) target = $region9
  $region8: #{multi_head_attention.5} parent=0 // pred_region
    _
  $region9: #{multi_head_attention.5} parent=0 // pred_fallthru
    _
  %p12 = scmp.eq.s32.totalorder 0, 0
  // Predicated region
  $region10: #{multi_head_attention.5} parent=0 // pred_check
    %p13 = pneg %p12
  $region11: #{multi_head_attention.5} parent=0 // pred_check_branch
    %15 = sbr.rel (%p13) target = $region13
  $region12: #{multi_head_attention.5} parent=0 // pred_region
    %vm16 = vcmask 523264
    %17 = vst.msk [vmem:[#allocation2] sm:$0xff] %vm16, 0.0
    %18 = vst.msk [vmem:[#allocation2 + $0x8] sm:$0xff] %vm16, 0.0
  $region13: #{multi_head_attention.5} parent=0 // pred_fallthru
    _
  %v19 = vld [vmem:[%s0] sm:$0xff]
  %v20 = vld [vmem:[%s0 + $0x8] sm:$0xff]
  %v21 = vpack.c.bf16 %v20, %v19
  %v22 = vld [vmem:[#allocation2] sm:$0xff]
  %v23 = vld [vmem:[#allocation2 + $0x8] sm:$0xff]
  %v24 = vld [vmem:[%s1] sm:$0xf]
  %v25 = vld [vmem:[%s1 + $0x4] sm:$0xf]
  %v26 = vld [vmem:[%s1 + $0x8] sm:$0xf]
  %v27 = vld [vmem:[%s1 + $0xc] sm:$0xf]
  %v32 = vunpack.c.l.b16 %v24
  %v33 = vunpack.c.l.b16 %v25
  %v34 = vunpack.c.l.b16 %v26
  %v35 = vunpack.c.l.b16 %v27
  %v36 = vpack.c.b16 %v33, %v32
  %v37 = vpack.c.b16 %v35, %v34
  %vm40 = vcmask 261120
  %v42 = vsel %vm40, %v21, 0
  %44 = vmatprep.subr.bf16.mxu0 0
  %45 = vmatpush1.bf16.msra.mxu0 %v36
  %46 = vmatprep.subr.bf16.mxu0 0
  %47 = vmatpush1.bf16.msra.mxu0 %v37
  %48 = vmatprep.subr.bf16.mxu0 0
  %49 = vmatpush1.bf16.msra.mxu0 0
  %50 = vmatprep.subr.bf16.mxu0 0
  %51 = vmatpush1.bf16.msra.mxu0 0
  %52 = vmatprep.subr.bf16.mxu0 0
  %53 = vmatpush1.bf16.msra.mxu0 0
  %54 = vmatprep.subr.bf16.mxu0 0
  %55 = vmatpush1.bf16.msra.mxu0 0
  %56 = vmatprep.subr.bf16.mxu0 0
  %57 = vmatpush1.bf16.msra.mxu0 0
  %58 = vmatprep.subr.bf16.mxu0 0
  %59 = vmatpush1.bf16.msra.mxu0 0
  %60 = vmatprep.subr.bf16.mxu0 0
  %61 = vmatpush1.bf16.msra.mxu0 0
  %62 = vmatprep.subr.bf16.mxu0 0
  %63 = vmatpush1.bf16.msra.mxu0 0
  %64 = vmatprep.subr.bf16.mxu0 0
  %65 = vmatpush1.bf16.msra.mxu0 0
  %66 = vmatprep.subr.bf16.mxu0 0
  %67 = vmatpush1.bf16.msra.mxu0 0
  %68 = vmatprep.subr.bf16.mxu0 0
  %69 = vmatpush1.bf16.msra.mxu0 0
  %70 = vmatprep.subr.bf16.mxu0 0
  %71 = vmatpush1.bf16.msra.mxu0 0
  %72 = vmatprep.subr.bf16.mxu0 0
  %73 = vmatpush1.bf16.msra.mxu0 0
  %74 = vmatprep.subr.bf16.mxu0 0
  %75 = vmatpush1.bf16.msra.mxu0 0
  %76 = vmatprep.mubr.bf16.mxu0 0
  %77 = vmatmul.mubr.bf16.gmra.mrb[0].mxu0 %v42
  %v78 = vpop.f32.mrb[0].mxu0
  %v79 = vadd.f32 0.0, %v78
  %v80 = vpop.f32.mrb[0].mxu0
  %v81 = vpop.f32.mrb[0].mxu0
  %v82 = vadd.f32 0.0, %v81
  %v83 = vpop.f32.mrb[0].mxu0
  %84 = vdwg.mxu0
  %v85 = vadd.f32 %v22, %v79
  %v86 = vadd.f32 %v23, %v82
  %vm87 = vcmask 523264
  %88 = vst.msk [vmem:[#allocation2] sm:$0xff] %vm87, %v85
  %89 = vst.msk [vmem:[#allocation2 + $0x8] sm:$0xff] %vm87, %v86
  // Predicated region
  $region14: #{multi_head_attention.5} parent=0 // pred_check
    %p90 = pneg %p12
  $region15: #{multi_head_attention.5} parent=0 // pred_check_branch
    %92 = sbr.rel (%p90) target = $region17
  $region16: #{multi_head_attention.5} parent=0 // pred_region
    %v93 = vld [vmem:[#allocation2] sm:$0xff]
    %v94 = vld [vmem:[#allocation2 + $0x8] sm:$0xff]
    %95 = vst.msk [vmem:[%s2] sm:$0xff] %vm87, %v93
    %96 = vst.msk [vmem:[%s2 + $0x8] sm:$0xff] %vm87, %v94
  $region17: #{multi_head_attention.5} parent=0 // pred_fallthru
    _
  // Predicated region
  $region18: #{multi_head_attention.5} parent=0 // pred_check
    _
  $region19: #{multi_head_attention.5} parent=0 // pred_check_branch
    %98 = sbr.rel (0) target = $region21
  $region20: #{multi_head_attention.5} parent=0 // pred_region
    _
  $region21: #{multi_head_attention.5} parent=0 // pred_fallthru
    _
  // Predicated region
  $region22: #{multi_head_attention.5} parent=0 // pred_check
    _
  $region23: #{multi_head_attention.5} parent=0 // pred_check_branch
    %100 = sbr.rel (0) target = $region25
  $region24: #{multi_head_attention.5} parent=0 // pred_region
    _
  $region25: #{multi_head_attention.5} parent=0 // pred_fallthru
    _

// kernel: multi_head_attention.6
$region0: #{multi_head_attention.6}
  #allocation0 [shape = 'u32[]', space=smem, size = 0x4, offset = 0x4, fixed_abs, tag = 'smem constant byte address 0x4 - core index']
  #allocation1 [shape = 'u32[144,128]{1,0:T(1,128)}', space=vmem, size = 0x12000, scoped, tag = 'internal scratch']
  #allocation2 [shape = 'f32[16,32]{1,0:T(8,128)}', space=vmem, size = 0x2000, scoped, tag = 'scratch operand']
  %s0 = inlined_call_operand.vmem [shape: f32[16,32], index: 0, kind: input, shape index: {}]
  %s1 = inlined_call_operand.vmem [shape: bf16[32,32], index: 1, kind: input, shape index: {}]
  %s2 = inlined_call_operand.vmem [shape: f32[16,32], index: 2, kind: output, shape index: {}]
  %s3 = sld [smem:[#allocation0]]
  $region26: #{multi_head_attention.6} parent=0
    _
  %s5 = ssub.s32 1, %s3
  %s6 = scalar_select 0, %s5, %s3
  // Predicated region
  $region2: #{multi_head_attention.6} parent=0 // pred_check
    _
  $region3: #{multi_head_attention.6} parent=0 // pred_check_branch
    %8 = sbr.rel (0) target = $region5
  $region4: #{multi_head_attention.6} parent=0 // pred_region
    _
  $region5: #{multi_head_attention.6} parent=0 // pred_fallthru
    _
  // Predicated region
  $region6: #{multi_head_attention.6} parent=0 // pred_check
    _
  $region7: #{multi_head_attention.6} parent=0 // pred_check_branch
    %10 = sbr.rel (0) target = $region9
  $region8: #{multi_head_attention.6} parent=0 // pred_region
    _
  $region9: #{multi_head_attention.6} parent=0 // pred_fallthru
    _
  %p12 = scmp.eq.s32.totalorder 0, 0
  // Predicated region
  $region10: #{multi_head_attention.6} parent=0 // pred_check
    %p13 = pneg %p12
  $region11: #{multi_head_attention.6} parent=0 // pred_check_branch
    %15 = sbr.rel (%p13) target = $region13
  $region12: #{multi_head_attention.6} parent=0 // pred_region
    %vm16 = vcmask 261120
    %17 = vst.msk [vmem:[#allocation2] sm:$0xff] %vm16, 0.0
    %18 = vst.msk [vmem:[#allocation2 + $0x8] sm:$0xff] %vm16, 0.0
  $region13: #{multi_head_attention.6} parent=0 // pred_fallthru
    _
  %v19 = vld [vmem:[%s0] sm:$0xff]
  %v20 = vld [vmem:[%s0 + $0x8] sm:$0xff]
  %v21 = vpack.c.bf16 %v20, %v19
  %v22 = vld [vmem:[#allocation2] sm:$0xff]
  %v23 = vld [vmem:[#allocation2 + $0x8] sm:$0xff]
  %v24 = vld [vmem:[%s1] sm:$0xf]
  %v25 = vld [vmem:[%s1 + $0x4] sm:$0xf]
  %v26 = vld [vmem:[%s1 + $0x8] sm:$0xf]
  %v27 = vld [vmem:[%s1 + $0xc] sm:$0xf]
  %v32 = vunpack.c.l.b16 %v24
  %v33 = vunpack.c.l.b16 %v25
  %v34 = vunpack.c.l.b16 %v26
  %v35 = vunpack.c.l.b16 %v27
  %v36 = vpack.c.b16 %v33, %v32
  %v37 = vpack.c.b16 %v35, %v34
  %vm40 = vcmask 261120
  %v42 = vsel %vm40, %v21, 0
  %44 = vmatprep.subr.bf16.mxu0 0
  %45 = vmatpush1.bf16.msra.mxu0 %v36
  %46 = vmatprep.subr.bf16.mxu0 0
  %47 = vmatpush1.bf16.msra.mxu0 %v37
  %48 = vmatprep.subr.bf16.mxu0 0
  %49 = vmatpush1.bf16.msra.mxu0 0
  %50 = vmatprep.subr.bf16.mxu0 0
  %51 = vmatpush1.bf16.msra.mxu0 0
  %52 = vmatprep.subr.bf16.mxu0 0
  %53 = vmatpush1.bf16.msra.mxu0 0
  %54 = vmatprep.subr.bf16.mxu0 0
  %55 = vmatpush1.bf16.msra.mxu0 0
  %56 = vmatprep.subr.bf16.mxu0 0
  %57 = vmatpush1.bf16.msra.mxu0 0
  %58 = vmatprep.subr.bf16.mxu0 0
  %59 = vmatpush1.bf16.msra.mxu0 0
  %60 = vmatprep.subr.bf16.mxu0 0
  %61 = vmatpush1.bf16.msra.mxu0 0
  %62 = vmatprep.subr.bf16.mxu0 0
  %63 = vmatpush1.bf16.msra.mxu0 0
  %64 = vmatprep.subr.bf16.mxu0 0
  %65 = vmatpush1.bf16.msra.mxu0 0
  %66 = vmatprep.subr.bf16.mxu0 0
  %67 = vmatpush1.bf16.msra.mxu0 0
  %68 = vmatprep.subr.bf16.mxu0 0
  %69 = vmatpush1.bf16.msra.mxu0 0
  %70 = vmatprep.subr.bf16.mxu0 0
  %71 = vmatpush1.bf16.msra.mxu0 0
  %72 = vmatprep.subr.bf16.mxu0 0
  %73 = vmatpush1.bf16.msra.mxu0 0
  %74 = vmatprep.subr.bf16.mxu0 0
  %75 = vmatpush1.bf16.msra.mxu0 0
  %76 = vmatprep.mubr.bf16.mxu0 0
  %77 = vmatmul.mubr.bf16.gmra.mrb[0].mxu0 %v42
  %v78 = vpop.f32.mrb[0].mxu0
  %v79 = vadd.f32 0.0, %v78
  %v80 = vpop.f32.mrb[0].mxu0
  %v81 = vpop.f32.mrb[0].mxu0
  %v82 = vadd.f32 0.0, %v81
  %v83 = vpop.f32.mrb[0].mxu0
  %84 = vdwg.mxu0
  %v85 = vadd.f32 %v22, %v79
  %v86 = vadd.f32 %v23, %v82
  %87 = vst.msk [vmem:[#allocation2] sm:$0xff] %vm40, %v85
  %88 = vst.msk [vmem:[#allocation2 + $0x8] sm:$0xff] %vm40, %v86
  // Predicated region
  $region14: #{multi_head_attention.6} parent=0 // pred_check
    %p89 = pneg %p12
  $region15: #{multi_head_attention.6} parent=0 // pred_check_branch
    %91 = sbr.rel (%p89) target = $region17
  $region16: #{multi_head_attention.6} parent=0 // pred_region
    %v92 = vld [vmem:[#allocation2] sm:$0xff]
    %v93 = vld [vmem:[#allocation2 + $0x8] sm:$0xff]
    %94 = vst.msk [vmem:[%s2] sm:$0xff] %vm40, %v92
    %95 = vst.msk [vmem:[%s2 + $0x8] sm:$0xff] %vm40, %v93
  $region17: #{multi_head_attention.6} parent=0 // pred_fallthru
    _
  // Predicated region
  $region18: #{multi_head_attention.6} parent=0 // pred_check
    _
  $region19: #{multi_head_attention.6} parent=0 // pred_check_branch
    %97 = sbr.rel (0) target = $region21
  $region20: #{multi_head_attention.6} parent=0 // pred_region
    _
  $region21: #{multi_head_attention.6} parent=0 // pred_fallthru
    _
  // Predicated region
  $region22: #{multi_head_attention.6} parent=0 // pred_check
    _
  $region23: #{multi_head_attention.6} parent=0 // pred_check_branch
    %99 = sbr.rel (0) target = $region25
  $region24: #{multi_head_attention.6} parent=0 // pred_region
    _
  $region25: #{multi_head_attention.6} parent=0 // pred_fallthru
    _

// kernel: multi_head_attention.9
$region0: #{multi_head_attention.9}
  #allocation0 [shape = 'u32[]', space=smem, size = 0x4, offset = 0x4, fixed_abs, tag = 'smem constant byte address 0x4 - core index']
  #allocation1 [shape = 'u32[144,128]{1,0:T(1,128)}', space=vmem, size = 0x12000, scoped, tag = 'internal scratch']
  #allocation2 [shape = 'f32[16,32]{1,0:T(8,128)}', space=vmem, size = 0x2000, scoped, tag = 'scratch operand']
  %s0 = inlined_call_operand.vmem [shape: bf16[16,64], index: 0, kind: input, shape index: {}]
  %s1 = inlined_call_operand.vmem [shape: bf16[64,32], index: 1, kind: input, shape index: {}]
  %s2 = inlined_call_operand.hbm [shape: f32[16,32], index: 2, kind: output, shape index: {}]
  %s3 = sld [smem:[#allocation0]]
  $region26: #{multi_head_attention.9} parent=0
    _
  %s5 = ssub.s32 1, %s3
  %s6 = scalar_select 0, %s5, %s3
  $region1: #{multi_head_attention.9} parent=0
    #allocation3 [shape = 'u8[8192]{0}', space=vmem, size = 0x2000, scoped, tag = 'output window, operand 0, single buffered']
    #allocation4 [shape = 's32[1]{0}', space=sflag, size = 0x4, scoped, tag = 'scoped memory for multi_head_attention.9']
    %7 = vsyncpa [#allocation4], 0
    // Predicated region
    $region2: #{multi_head_attention.9} parent=1 // pred_check
      _
    $region3: #{multi_head_attention.9} parent=1 // pred_check_branch
      %9 = sbr.rel (0) target = $region5
    $region4: #{multi_head_attention.9} parent=1 // pred_region
      _
    $region5: #{multi_head_attention.9} parent=1 // pred_fallthru
      _
    // Predicated region
    $region6: #{multi_head_attention.9} parent=1 // pred_check
      _
    $region7: #{multi_head_attention.9} parent=1 // pred_check_branch
      %11 = sbr.rel (0) target = $region9
    $region8: #{multi_head_attention.9} parent=1 // pred_region
      _
    $region9: #{multi_head_attention.9} parent=1 // pred_fallthru
      _
    %p13 = scmp.eq.s32.totalorder 0, 0
    // Predicated region
    $region10: #{multi_head_attention.9} parent=1 // pred_check
      %p14 = pneg %p13
    $region11: #{multi_head_attention.9} parent=1 // pred_check_branch
      %16 = sbr.rel (%p14) target = $region13
    $region12: #{multi_head_attention.9} parent=1 // pred_region
      %vm17 = vcmask 261120
      %18 = vst.msk [vmem:[#allocation2] sm:$0xff] %vm17, 0.0
      %19 = vst.msk [vmem:[#allocation2 + $0x8] sm:$0xff] %vm17, 0.0
    $region13: #{multi_head_attention.9} parent=1 // pred_fallthru
      _
    %v20 = vld [vmem:[%s0] sm:$0xf]
    %v21 = vld [vmem:[%s0 + $0x4] sm:$0xf]
    %v22 = vld [vmem:[#allocation2] sm:$0xff]
    %v23 = vld [vmem:[#allocation2 + $0x8] sm:$0xff]
    %v24 = vld [vmem:[%s1] sm:$0xf]
    %v25 = vld [vmem:[%s1 + $0x4] sm:$0xf]
    %v26 = vld [vmem:[%s1 + $0x8] sm:$0xf]
    %v27 = vld [vmem:[%s1 + $0xc] sm:$0xf]
    %v28 = vld [vmem:[%s1 + $0x10] sm:$0xf]
    %v29 = vld [vmem:[%s1 + $0x14] sm:$0xf]
    %v30 = vld [vmem:[%s1 + $0x18] sm:$0xf]
    %v31 = vld [vmem:[%s1 + $0x1c] sm:$0xf]
    %v34 = vunpack.c.l.b16 %v20
    %v35 = vunpack.c.l.b16 %v21
    %v36 = vpack.c.b16 %v35, %v34
    %v45 = vunpack.c.l.b16 %v24
    %v46 = vunpack.c.l.b16 %v25
    %v47 = vunpack.c.l.b16 %v26
    %v48 = vunpack.c.l.b16 %v27
    %v49 = vunpack.c.l.b16 %v28
    %v50 = vunpack.c.l.b16 %v29
    %v51 = vunpack.c.l.b16 %v30
    %v52 = vunpack.c.l.b16 %v31
    %v53 = vpack.c.b16 %v46, %v45
    %v54 = vpack.c.b16 %v48, %v47
    %v55 = vpack.c.b16 %v50, %v49
    %v56 = vpack.c.b16 %v52, %v51
    %vm61 = vcmask 523264
    %v63 = vsel %vm61, %v36, 0
    %65 = vmatprep.subr.bf16.mxu0 0
    %66 = vmatpush1.bf16.msra.mxu0 %v53
    %67 = vmatprep.subr.bf16.mxu0 0
    %68 = vmatpush1.bf16.msra.mxu0 %v54
    %69 = vmatprep.subr.bf16.mxu0 0
    %70 = vmatpush1.bf16.msra.mxu0 %v55
    %71 = vmatprep.subr.bf16.mxu0 0
    %72 = vmatpush1.bf16.msra.mxu0 %v56
    %73 = vmatprep.subr.bf16.mxu0 0
    %74 = vmatpush1.bf16.msra.mxu0 0
    %75 = vmatprep.subr.bf16.mxu0 0
    %76 = vmatpush1.bf16.msra.mxu0 0
    %77 = vmatprep.subr.bf16.mxu0 0
    %78 = vmatpush1.bf16.msra.mxu0 0
    %79 = vmatprep.subr.bf16.mxu0 0
    %80 = vmatpush1.bf16.msra.mxu0 0
    %81 = vmatprep.subr.bf16.mxu0 0
    %82 = vmatpush1.bf16.msra.mxu0 0
    %83 = vmatprep.subr.bf16.mxu0 0
    %84 = vmatpush1.bf16.msra.mxu0 0
    %85 = vmatprep.subr.bf16.mxu0 0
    %86 = vmatpush1.bf16.msra.mxu0 0
    %87 = vmatprep.subr.bf16.mxu0 0
    %88 = vmatpush1.bf16.msra.mxu0 0
    %89 = vmatprep.subr.bf16.mxu0 0
    %90 = vmatpush1.bf16.msra.mxu0 0
    %91 = vmatprep.subr.bf16.mxu0 0
    %92 = vmatpush1.bf16.msra.mxu0 0
    %93 = vmatprep.subr.bf16.mxu0 0
    %94 = vmatpush1.bf16.msra.mxu0 0
    %95 = vmatprep.subr.bf16.mxu0 0
    %96 = vmatpush1.bf16.msra.mxu0 0
    %97 = vmatprep.mubr.bf16.mxu0 0
    %98 = vmatmul.mubr.bf16.gmra.mrb[0].mxu0 %v63
    %v99 = vpop.f32.mrb[0].mxu0
    %v100 = vadd.f32 0.0, %v99
    %v101 = vpop.f32.mrb[0].mxu0
    %v102 = vpop.f32.mrb[0].mxu0
    %v103 = vadd.f32 0.0, %v102
    %v104 = vpop.f32.mrb[0].mxu0
    %105 = vdwg.mxu0
    %v106 = vadd.f32 %v22, %v100
    %v107 = vadd.f32 %v23, %v103
    %vm108 = vcmask 261120
    %109 = vst.msk [vmem:[#allocation2] sm:$0xff] %vm108, %v106
    %110 = vst.msk [vmem:[#allocation2 + $0x8] sm:$0xff] %vm108, %v107
    // Predicated region
    $region14: #{multi_head_attention.9} parent=1 // pred_check
      %p111 = pneg %p13
    $region15: #{multi_head_attention.9} parent=1 // pred_check_branch
      %113 = sbr.rel (%p111) target = $region17
    $region16: #{multi_head_attention.9} parent=1 // pred_region
      %v114 = vld [vmem:[#allocation2] sm:$0xff]
      %v115 = vld [vmem:[#allocation2 + $0x8] sm:$0xff]
      %116 = vst.msk [vmem:[#allocation3] sm:$0xff] %vm108, %v114
      %117 = vst.msk [vmem:[#allocation3 + $0x8] sm:$0xff] %vm108, %v115
    $region17: #{multi_head_attention.9} parent=1 // pred_fallthru
      _
    // Predicated region
    $region18: #{multi_head_attention.9} parent=1 // pred_check
      _
    $region19: #{multi_head_attention.9} parent=1 // pred_check_branch
      %119 = sbr.rel (0) target = $region21
    $region20: #{multi_head_attention.9} parent=1 // pred_region
      %s121 = ssub.s32 256, 256
      %122 = vsyncadd [#allocation4], %s121
      %s123 = sshll.u32 [#allocation3], 4
      %s124 = int_to_ptr.vmem [resolvable:$true] %s123
      %129 = dma.vmem_to_hbm [thread:$0]  %s124, 256, %s2, [#allocation4], 128, 128, 8
    $region21: #{multi_head_attention.9} parent=1 // pred_fallthru
      _
    // Predicated region
    $region22: #{multi_head_attention.9} parent=1 // pred_check
      _
    $region23: #{multi_head_attention.9} parent=1 // pred_check_branch
      %131 = sbr.rel (0) target = $region25
    $region24: #{multi_head_attention.9} parent=1 // pred_region
      %132 = dma.done [#allocation4], 256
    $region25: #{multi_head_attention.9} parent=1 // pred_fallthru
      _
    %133 = vsyncpa [#allocation4], 1

// kernel: multi_head_attention.8
$region0: #{multi_head_attention.8}
  #allocation0 [shape = 'u32[]', space=smem, size = 0x4, offset = 0x4, fixed_abs, tag = 'smem constant byte address 0x4 - core index']
  #allocation1 [shape = 'u32[144,128]{1,0:T(1,128)}', space=vmem, size = 0x12000, scoped, tag = 'internal scratch']
  #allocation2 [shape = 'f32[16,1]{1,0:T(8,128)}', space=vmem, size = 0x2000, scoped, tag = 'scratch operand']
  #allocation3 [shape = 'f32[16,1]{1,0:T(8,128)}', space=vmem, size = 0x2000, scoped, tag = 'scratch operand']
  #allocation4 [shape = 'f32[16,16]{1,0:T(8,128)}', space=vmem, size = 0x2000, scoped, tag = 'scratch operand']
  %s0 = inlined_call_operand.vmem [shape: s32[16,1], index: 0, kind: input, shape index: {}]
  %s1 = inlined_call_operand.vmem [shape: bf16[2,2,16,16], index: 1, kind: input, shape index: {}]
  %s2 = inlined_call_operand.vmem [shape: bf16[2,2,16,8], index: 2, kind: input, shape index: {}]
  %s3 = inlined_call_operand.vmem [shape: bf16[2,2,8,16], index: 3, kind: input, shape index: {}]
  %s4 = inlined_call_operand.vmem [shape: bf16[2,2,16,16], index: 4, kind: output, shape index: {}]
  %s5 = sld [smem:[#allocation0]]
  $region57: #{multi_head_attention.8} parent=0
    _
  %s7 = ssub.s32 1, %s5
  %s8 = scalar_select 0, %s7, %s5
  loop: start=0, step=1, limit=6
  $region2: #{multi_head_attention.8} parent=0 // loop_pre_header
    _
  $region3: #{multi_head_attention.8} parent=0 // loop_header
    %s10 = sphi 0, %s14
    %p11 = scmp.ge.s32.totalorder %s10, 6
    %s17 = sphi 0, %s36
    %s18 = sphi 0, %s32
    %s19 = sphi 0, %s28
    %s20 = sphi 0, %s17
    %s21 = sphi 0, %s18
    %s22 = sphi 0, %s19
    %s23 = sphi 0, %s20
    %s24 = sphi 0, %s21
    %s25 = sphi 0, %s22
    %s37 = sphi 0, %s37
    %s39 = sphi 0, %s37
    %s40 = sphi 0, %s39
    %s54 = sphi 0, %s40
    %s62 = sphi 0, %s64
    %s65 = sphi 0, %s62
    %s66 = sphi 0, %s65
    %s82 = sphi 0, %s66
    %s92 = sphi 0, %s94
    %s95 = sphi 0, %s92
    %s96 = sphi 0, %s95
    %s112 = sphi 0, %s96
    %s122 = sphi 0, %s124
    %s125 = sphi 0, %s122
    %s126 = sphi 0, %s125
    %s142 = sphi 0, %s126
    %s150 = sphi 0, %s152
    %s153 = sphi 0, %s150
    %s154 = sphi 0, %s153
    %s170 = sphi 0, %s154
  $region4: #{multi_head_attention.8} parent=0 // loop_header_branch
    %13 = sbr.rel (%p11) target = $region8
  $region5: #{multi_head_attention.8} parent=0 // loop_body
    %s15 = ssub.s32 %s10, 1
    %s16 = ssub.s32 %s10, 2
    %s26 = sadd.s32 1, %s19
    %p27 = scmp.ge.s32.totalorder %s26, 1
    %s28 = scalar_select %p27, 0, %s26
    %s29 = sadd.s32 1, %s18
    %s30 = scalar_select %p27, %s29, %s18
    %p31 = scmp.ge.s32.totalorder %s30, 2
    %s32 = scalar_select %p31, 0, %s30
    %s33 = sadd.s32 1, %s17
    %s34 = scalar_select %p31, %s33, %s17
    %p35 = scmp.ge.s32.totalorder %s34, 2
    %s36 = scalar_select %p35, 0, %s34
    %s38 = sadd.s32 %s37, 1
    %p41 = scmp.eq.s32.totalorder %s10, 3
    %p42 = scmp.ne.s32.totalorder %s37, %s39
    %p43 = scmp.eq.s32.totalorder %s10, 0
    %p44 = por %p42, %p43
    %p45 = scmp.ne.s32.totalorder %s37, %s39
    %p46 = scmp.eq.s32.totalorder %s15, 3
    %p47 = por %p45, %p46
    %p48 = scmp.ne.s32.totalorder %s39, %s40
    %p49 = scmp.eq.s32.totalorder %s15, 0
    %p50 = por %p48, %p49
    %p51 = scmp.ne.s32.totalorder %s39, %s40
    %p52 = scmp.eq.s32.totalorder %s16, 3
    %p53 = por %p51, %p52
    %p55 = scmp.ne.s32.totalorder %s40, %s54
    %p56 = scmp.eq.s32.totalorder %s16, 0
    %p57 = por %p55, %p56
    %s58 = ssub.s32 %s17, %s36
    %s59 = ssub.s32 %s18, %s32
    %s60 = sor.u32 %s58, %s59
    %p61 = scmp.eq.s32.totalorder %s60, 0
    %s63 = sadd.s32 %s62, 1
    %s64 = scalar_select %p61, %s62, %s63
    %p67 = pneg %p61
    %p68 = scmp.eq.s32.totalorder %s10, 3
    %p69 = por %p67, %p68
    %p70 = scmp.ne.s32.totalorder %s62, %s65
    %p71 = scmp.eq.s32.totalorder %s10, 0
    %p72 = por %p70, %p71
    %p73 = scmp.ne.s32.totalorder %s62, %s65
    %p74 = scmp.eq.s32.totalorder %s15, 3
    %p75 = por %p73, %p74
    %p76 = scmp.ne.s32.totalorder %s65, %s66
    %p77 = scmp.eq.s32.totalorder %s15, 0
    %p78 = por %p76, %p77
    %p79 = scmp.ne.s32.totalorder %s65, %s66
    %p80 = scmp.eq.s32.totalorder %s16, 3
    %p81 = por %p79, %p80
    %p83 = scmp.ne.s32.totalorder %s66, %s82
    %p84 = scmp.eq.s32.totalorder %s16, 0
    %p85 = por %p83, %p84
    %s86 = ssub.s32 %s17, %s36
    %s87 = ssub.s32 %s18, %s32
    %s88 = sor.u32 %s86, %s87
    %s89 = ssub.s32 %s19, %s28
    %s90 = sor.u32 %s88, %s89
    %p91 = scmp.eq.s32.totalorder %s90, 0
    %s93 = sadd.s32 %s92, 1
    %s94 = scalar_select %p91, %s92, %s93
    %p97 = pneg %p91
    %p98 = scmp.eq.s32.totalorder %s10, 3
    %p99 = por %p97, %p98
    %p100 = scmp.ne.s32.totalorder %s92, %s95
    %p101 = scmp.eq.s32.totalorder %s10, 0
    %p102 = por %p100, %p101
    %p103 = scmp.ne.s32.totalorder %s92, %s95
    %p104 = scmp.eq.s32.totalorder %s15, 3
    %p105 = por %p103, %p104
    %p106 = scmp.ne.s32.totalorder %s95, %s96
    %p107 = scmp.eq.s32.totalorder %s15, 0
    %p108 = por %p106, %p107
    %p109 = scmp.ne.s32.totalorder %s95, %s96
    %p110 = scmp.eq.s32.totalorder %s16, 3
    %p111 = por %p109, %p110
    %p113 = scmp.ne.s32.totalorder %s96, %s112
    %p114 = scmp.eq.s32.totalorder %s16, 0
    %p115 = por %p113, %p114
    %s116 = ssub.s32 %s17, %s36
    %s117 = ssub.s32 %s18, %s32
    %s118 = sor.u32 %s116, %s117
    %s119 = ssub.s32 %s19, %s28
    %s120 = sor.u32 %s118, %s119
    %p121 = scmp.eq.s32.totalorder %s120, 0
    %s123 = sadd.s32 %s122, 1
    %s124 = scalar_select %p121, %s122, %s123
    %p127 = pneg %p121
    %p128 = scmp.eq.s32.totalorder %s10, 3
    %p129 = por %p127, %p128
    %p130 = scmp.ne.s32.totalorder %s122, %s125
    %p131 = scmp.eq.s32.totalorder %s10, 0
    %p132 = por %p130, %p131
    %p133 = scmp.ne.s32.totalorder %s122, %s125
    %p134 = scmp.eq.s32.totalorder %s15, 3
    %p135 = por %p133, %p134
    %p136 = scmp.ne.s32.totalorder %s125, %s126
    %p137 = scmp.eq.s32.totalorder %s15, 0
    %p138 = por %p136, %p137
    %p139 = scmp.ne.s32.totalorder %s125, %s126
    %p140 = scmp.eq.s32.totalorder %s16, 3
    %p141 = por %p139, %p140
    %p143 = scmp.ne.s32.totalorder %s126, %s142
    %p144 = scmp.eq.s32.totalorder %s16, 0
    %p145 = por %p143, %p144
    %s146 = ssub.s32 %s17, %s36
    %s147 = ssub.s32 %s18, %s32
    %s148 = sor.u32 %s146, %s147
    %p149 = scmp.eq.s32.totalorder %s148, 0
    %s151 = sadd.s32 %s150, 1
    %s152 = scalar_select %p149, %s150, %s151
    %p155 = pneg %p149
    %p156 = scmp.eq.s32.totalorder %s10, 3
    %p157 = por %p155, %p156
    %p158 = scmp.ne.s32.totalorder %s150, %s153
    %p159 = scmp.eq.s32.totalorder %s10, 0
    %p160 = por %p158, %p159
    %p161 = scmp.ne.s32.totalorder %s150, %s153
    %p162 = scmp.eq.s32.totalorder %s15, 3
    %p163 = por %p161, %p162
    %p164 = scmp.ne.s32.totalorder %s153, %s154
    %p165 = scmp.eq.s32.totalorder %s15, 0
    %p166 = por %p164, %p165
    %p167 = scmp.ne.s32.totalorder %s153, %s154
    %p168 = scmp.eq.s32.totalorder %s16, 3
    %p169 = por %p167, %p168
    %p171 = scmp.ne.s32.totalorder %s154, %s170
    %p172 = scmp.eq.s32.totalorder %s16, 0
    %p173 = por %p171, %p172
    %p174 = scmp.le.s32.totalorder 1, %s10
    %p175 = scmp.lt.s32.totalorder %s10, 5
    %p176 = pnand %p174, %p175
    %p177 = pneg %p176
    // Predicated region
    $region9: #{multi_head_attention.8} parent=5 // pred_check
      _
    $region10: #{multi_head_attention.8} parent=5 // pred_check_branch
      %179 = sbr.rel (%p176) target = $region12
    $region11: #{multi_head_attention.8} parent=5 // pred_region
      %s180 = ssub.s32 %s10, 1
      // Predicated region
      $region13: #{multi_head_attention.8} parent=11 // pred_check
        %p181 = pneg %p50
      $region14: #{multi_head_attention.8} parent=11 // pred_check_branch
        %183 = sbr.rel (%p181) target = $region16
      $region15: #{multi_head_attention.8} parent=11 // pred_region
        _
      $region16: #{multi_head_attention.8} parent=11 // pred_fallthru
        _
    $region12: #{multi_head_attention.8} parent=5 // pred_fallthru
      _
    %p184 = scmp.lt.s32.totalorder %s10, 4
    // Predicated region
    $region17: #{multi_head_attention.8} parent=5 // pred_check
      %p185 = pneg %p184
    $region18: #{multi_head_attention.8} parent=5 // pred_check_branch
      %187 = sbr.rel (%p185) target = $region20
    $region19: #{multi_head_attention.8} parent=5 // pred_region
      // Predicated region
      $region21: #{multi_head_attention.8} parent=19 // pred_check
        %p188 = pneg %p72
      $region22: #{multi_head_attention.8} parent=19 // pred_check_branch
        %190 = sbr.rel (%p188) target = $region24
      $region23: #{multi_head_attention.8} parent=19 // pred_region
        %p191 = scmp.lt.s32.totalorder %s17, 1
        %s192 = scalar_select %p191, %s17, 1
        %p193 = scmp.lt.s32.totalorder %s18, 1
        %s194 = scalar_select %p193, %s18, 1
        %s195 = smul.addr %s194, 2
        %s196 = smul.addr %s192, 4
        %s197 = sadd.s32 %s195, %s196
        %s198 = smul.addr %s197, 4
        %s199 = scalar_lea.vmem %s1, %s198
      $region24: #{multi_head_attention.8} parent=19 // pred_fallthru
        _
      // Predicated region
      $region25: #{multi_head_attention.8} parent=19 // pred_check
        %p200 = pneg %p102
      $region26: #{multi_head_attention.8} parent=19 // pred_check_branch
        %202 = sbr.rel (%p200) target = $region28
      $region27: #{multi_head_attention.8} parent=19 // pred_region
        %p203 = scmp.lt.s32.totalorder %s17, 1
        %s204 = scalar_select %p203, %s17, 1
        %p205 = scmp.lt.s32.totalorder %s18, 1
        %s206 = scalar_select %p205, %s18, 1
        %p207 = scmp.lt.s32.totalorder %s19, 0
        %s208 = scalar_select %p207, %s19, 0
        %s209 = smul.addr %s206, 2
        %s210 = sadd.s32 %s208, %s209
        %s211 = smul.addr %s204, 4
        %s212 = sadd.s32 %s210, %s211
        %s213 = smul.addr %s212, 4
        %s214 = scalar_lea.vmem %s2, %s213
      $region28: #{multi_head_attention.8} parent=19 // pred_fallthru
        _
      // Predicated region
      $region29: #{multi_head_attention.8} parent=19 // pred_check
        %p215 = pneg %p132
      $region30: #{multi_head_attention.8} parent=19 // pred_check_branch
        %217 = sbr.rel (%p215) target = $region32
      $region31: #{multi_head_attention.8} parent=19 // pred_region
        %p218 = scmp.lt.s32.totalorder %s17, 1
        %s219 = scalar_select %p218, %s17, 1
        %p220 = scmp.lt.s32.totalorder %s18, 1
        %s221 = scalar_select %p220, %s18, 1
        %p222 = scmp.lt.s32.totalorder %s19, 0
        %s223 = scalar_select %p222, %s19, 0
        %s224 = sadd.s32 %s223, %s221
        %s225 = smul.addr %s219, 2
        %s226 = sadd.s32 %s224, %s225
        %s227 = smul.addr %s226, 4
        %s228 = scalar_lea.vmem %s3, %s227
      $region32: #{multi_head_attention.8} parent=19 // pred_fallthru
        _
    $region20: #{multi_head_attention.8} parent=5 // pred_fallthru
      _
    %p229 = scmp.le.s32.totalorder 1, %s10
    %p230 = scmp.lt.s32.totalorder %s10, 5
    %p231 = pnand %p229, %p230
    %p232 = pneg %p231
    // Predicated region
    $region33: #{multi_head_attention.8} parent=5 // pred_check
      _
    $region34: #{multi_head_attention.8} parent=5 // pred_check_branch
      %234 = sbr.rel (%p231) target = $region36
    $region35: #{multi_head_attention.8} parent=5 // pred_region
      %s235 = ssub.s32 %s10, 1
      %p236 = pneg %p50
      %p237 = pneg %p47
      %p238 = scmp.lt.s32.totalorder %s20, 1
      %s239 = scalar_select %p238, %s20, 1
      %p240 = scmp.lt.s32.totalorder %s21, 1
      %s241 = scalar_select %p240, %s21, 1
      %s242 = smul.addr %s241, 2
      %s243 = smul.addr %s239, 4
      %s244 = sadd.s32 %s242, %s243
      %s245 = smul.addr %s244, 4
      %s246 = scalar_lea.vmem %s1, %s245
      %p247 = pneg %p78
      %p248 = pneg %p75
      %p249 = scmp.lt.s32.totalorder %s20, 1
      %s250 = scalar_select %p249, %s20, 1
      %p251 = scmp.lt.s32.totalorder %s21, 1
      %s252 = scalar_select %p251, %s21, 1
      %p253 = scmp.lt.s32.totalorder %s22, 0
      %s254 = scalar_select %p253, %s22, 0
      %s255 = smul.addr %s252, 2
      %s256 = sadd.s32 %s254, %s255
      %s257 = smul.addr %s250, 4
      %s258 = sadd.s32 %s256, %s257
      %s259 = smul.addr %s258, 4
      %s260 = scalar_lea.vmem %s2, %s259
      %p261 = pneg %p108
      %p262 = pneg %p105
      %p263 = scmp.lt.s32.totalorder %s20, 1
      %s264 = scalar_select %p263, %s20, 1
      %p265 = scmp.lt.s32.totalorder %s21, 1
      %s266 = scalar_select %p265, %s21, 1
      %p267 = scmp.lt.s32.totalorder %s22, 0
      %s268 = scalar_select %p267, %s22, 0
      %s269 = sadd.s32 %s268, %s266
      %s270 = smul.addr %s264, 2
      %s271 = sadd.s32 %s269, %s270
      %s272 = smul.addr %s271, 4
      %s273 = scalar_lea.vmem %s3, %s272
      %p274 = pneg %p138
      %p275 = pneg %p135
      %p276 = pneg %p166
      %p277 = pneg %p163
      %p278 = scmp.lt.s32.totalorder %s20, 1
      %s279 = scalar_select %p278, %s20, 1
      %p280 = scmp.lt.s32.totalorder %s21, 1
      %s281 = scalar_select %p280, %s21, 1
      %s282 = smul.addr %s281, 2
      %s283 = smul.addr %s279, 4
      %s284 = sadd.s32 %s282, %s283
      %s285 = smul.addr %s284, 4
      %s286 = scalar_lea.vmem %s4, %s285
      %p287 = scmp.lt.s32.totalorder %s20, 1
      %s288 = scalar_select %p287, %s20, 1
      %p289 = scmp.lt.s32.totalorder %s21, 1
      %s290 = scalar_select %p289, %s21, 1
      %s291 = smul.addr %s290, 2
      %s292 = smul.addr %s288, 4
      %s293 = sadd.s32 %s291, %s292
      %s294 = smul.addr %s293, 4
      %s295 = scalar_lea.vmem %s1, %s294
      %p296 = scmp.lt.s32.totalorder %s20, 1
      %s297 = scalar_select %p296, %s20, 1
      %p298 = scmp.lt.s32.totalorder %s21, 1
      %s299 = scalar_select %p298, %s21, 1
      %p300 = scmp.lt.s32.totalorder %s22, 0
      %s301 = scalar_select %p300, %s22, 0
      %s302 = smul.addr %s299, 2
      %s303 = sadd.s32 %s301, %s302
      %s304 = smul.addr %s297, 4
      %s305 = sadd.s32 %s303, %s304
      %s306 = smul.addr %s305, 4
      %s307 = scalar_lea.vmem %s2, %s306
      %p308 = scmp.lt.s32.totalorder %s20, 1
      %s309 = scalar_select %p308, %s20, 1
      %p310 = scmp.lt.s32.totalorder %s21, 1
      %s311 = scalar_select %p310, %s21, 1
      %p312 = scmp.lt.s32.totalorder %s22, 0
      %s313 = scalar_select %p312, %s22, 0
      %s314 = sadd.s32 %s313, %s311
      %s315 = smul.addr %s309, 2
      %s316 = sadd.s32 %s314, %s315
      %s317 = smul.addr %s316, 4
      %s318 = scalar_lea.vmem %s3, %s317
      %p319 = scmp.lt.s32.totalorder %s20, 1
      %s320 = scalar_select %p319, %s20, 1
      %p321 = scmp.lt.s32.totalorder %s21, 1
      %s322 = scalar_select %p321, %s21, 1
      %s323 = smul.addr %s322, 2
      %s324 = smul.addr %s320, 4
      %s325 = sadd.s32 %s323, %s324
      %s326 = smul.addr %s325, 4
      %s327 = scalar_lea.vmem %s4, %s326
      %p329 = scmp.eq.s32.totalorder %s22, 0
      // Predicated region
      $region37: #{multi_head_attention.8} parent=35 // pred_check
        %p330 = pneg %p329
      $region38: #{multi_head_attention.8} parent=35 // pred_check_branch
        %332 = sbr.rel (%p330) target = $region40
      $region39: #{multi_head_attention.8} parent=35 // pred_region
        %vm333 = vcmask 7168
        %334 = vst.msk [vmem:[#allocation2] sm:$0xff] %vm333, -1e+30
        %335 = vst.msk [vmem:[#allocation2 + $0x8] sm:$0xff] %vm333, -1e+30
        %336 = vst.msk [vmem:[#allocation3] sm:$0xff] %vm333, 0.0
        %337 = vst.msk [vmem:[#allocation3 + $0x8] sm:$0xff] %vm333, 0.0
        %vm338 = vcmask 130048
        %339 = vst.msk [vmem:[#allocation4] sm:$0xff] %vm338, 0.0
        %340 = vst.msk [vmem:[#allocation4 + $0x8] sm:$0xff] %vm338, 0.0
      $region40: #{multi_head_attention.8} parent=35 // pred_fallthru
        _
      %v341 = vld [vmem:[%s295] sm:$0xf]
      %v342 = vld [vmem:[%s295 + $0x4] sm:$0xf]
      %v343 = vld [vmem:[%s307] sm:$0xf]
      %v344 = vld [vmem:[%s307 + $0x4] sm:$0xf]
      %v347 = vunpack.c.l.b16 %v341
      %v348 = vunpack.c.l.b16 %v342
      %v349 = vpack.c.b16 %v348, %v347
      %v352 = vunpack.c.l.b16 %v343
      %v353 = vunpack.c.l.b16 %v344
      %v354 = vpack.c.b16 %v353, %v352
      %vm356 = vcmask 130048
      %v358 = vsel %vm356, %v349, 0
      %360 = vmatprep.subr.bf16.mxu0 0
      %361 = vmatpush1.bf16.msra.mxu0 %v354
      %362 = vmatprep.subr.bf16.mxu0 0
      %363 = vmatpush1.bf16.msra.mxu0 0
      %364 = vmatprep.subr.bf16.mxu0 0
      %365 = vmatpush1.bf16.msra.mxu0 0
      %366 = vmatprep.subr.bf16.mxu0 0
      %367 = vmatpush1.bf16.msra.mxu0 0
      %368 = vmatprep.subr.bf16.mxu0 0
      %369 = vmatpush1.bf16.msra.mxu0 0
      %370 = vmatprep.subr.bf16.mxu0 0
      %371 = vmatpush1.bf16.msra.mxu0 0
      %372 = vmatprep.subr.bf16.mxu0 0
      %373 = vmatpush1.bf16.msra.mxu0 0
      %374 = vmatprep.subr.bf16.mxu0 0
      %375 = vmatpush1.bf16.msra.mxu0 0
      %376 = vmatprep.subr.bf16.mxu0 0
      %377 = vmatpush1.bf16.msra.mxu0 0
      %378 = vmatprep.subr.bf16.mxu0 0
      %379 = vmatpush1.bf16.msra.mxu0 0
      %380 = vmatprep.subr.bf16.mxu0 0
      %381 = vmatpush1.bf16.msra.mxu0 0
      %382 = vmatprep.subr.bf16.mxu0 0
      %383 = vmatpush1.bf16.msra.mxu0 0
      %384 = vmatprep.subr.bf16.mxu0 0
      %385 = vmatpush1.bf16.msra.mxu0 0
      %386 = vmatprep.subr.bf16.mxu0 0
      %387 = vmatpush1.bf16.msra.mxu0 0
      %388 = vmatprep.subr.bf16.mxu0 0
      %389 = vmatpush1.bf16.msra.mxu0 0
      %390 = vmatprep.subr.bf16.mxu0 0
      %391 = vmatpush1.bf16.msra.mxu0 0
      %392 = vmatprep.mubr.bf16.mxu0 0
      %393 = vmatmul.mubr.bf16.gmra.mrb[0].mxu0 %v358
      %v394 = vpop.f32.mrb[0].mxu0
      %v395 = vadd.f32 0.0, %v394
      %v396 = vpop.f32.mrb[0].mxu0
      %v397 = vpop.f32.mrb[0].mxu0
      %v398 = vadd.f32 0.0, %v397
      %v399 = vpop.f32.mrb[0].mxu0
      %400 = vdwg.mxu0
      %v401 = vlaneseq
      %v402 = vand.u32 %v401, 127
      %s403 = smul.u32 %s22, 8
      %v404 = vstv %s403
      %v405 = vadd.s32 %v402, %v404
      %v406 = vld [vmem:[%s0] sm:$0xff]
      %v407 = vld [vmem:[%s0 + $0x8] sm:$0xff]
      %408 = vset.pattern.permute.xlu0 0
      %409 = vperm.xlu0 %408, %v406
      %v410 = vpop.permute.xlu0 %409
      %411 = vset.pattern.permute.xlu0 0
      %412 = vperm.xlu0 %411, %v407
      %v413 = vpop.permute.xlu0 %412
      %vm414 = vcmp.le.s32.totalorder %v405, %v410
      %vm415 = vcmp.le.s32.totalorder %v405, %v413
      %v416 = vsel %vm414, %v395, -1e+30
      %v417 = vsel %vm415, %v398, -1e+30
      %v418 = vld [vmem:[#allocation2] sm:$0xff]
      %v419 = vld [vmem:[#allocation2 + $0x8] sm:$0xff]
      %vm420 = vcmask 64512
      %v421 = vsel %vm420, %v416, -inf
      %422 = vmax.xlane.f32.xlu0 %v421
      %v423 = vpop.xlane.xlu0 %422
      %v424 = vsel %vm420, %v417, -inf
      %425 = vmax.xlane.f32.xlu0 %v424
      %v426 = vpop.xlane.xlu0 %425
      %v427 = vmax.f32 %v418, %v423
      %v428 = vmax.f32 %v419, %v426
      %v429 = vsub.f32 %v418, %v427
      %v430 = vsub.f32 %v419, %v428
      %v431 = vmul.f32 %v429, 1.442695
      %v432 = vpow.pop %v431
      %v433 = vmul.f32 %v430, 1.442695
      %v434 = vpow.pop %v433
      %436 = vset.pattern.permute.xlu0 0
      %437 = vperm.xlu0 %436, %v427
      %v438 = vpop.permute.xlu0 %437
      %441 = vset.pattern.permute.xlu0 0
      %442 = vperm.xlu0 %441, %v428
      %v443 = vpop.permute.xlu0 %442
      %v445 = vsub.f32 %v416, %v438
      %v446 = vsub.f32 %v417, %v443
      %v447 = vmul.f32 %v445, 1.442695
      %v448 = vpow.pop %v447
      %v449 = vmul.f32 %v446, 1.442695
      %v450 = vpow.pop %v449
      %v451 = vsel %vm414, %v448, 0.0
      %v452 = vsel %vm415, %v450, 0.0
      %v453 = vld [vmem:[#allocation3] sm:$0xff]
      %v454 = vld [vmem:[#allocation3 + $0x8] sm:$0xff]
      %v455 = vmul.f32 %v432, %v453
      %v456 = vmul.f32 %v434, %v454
      %v457 = vsel %vm420, %v451, 0.0
      %458 = vadd.xlane.f32.xlu0 %v457
      %v459 = vpop.xlane.xlu0 %458
      %v460 = vsel %vm420, %v452, 0.0
      %461 = vadd.xlane.f32.xlu0 %v460
      %v462 = vpop.xlane.xlu0 %461
      %v463 = vadd.f32 %v455, %v459
      %v464 = vadd.f32 %v456, %v462
      %vm465 = vcmask 7168
      %466 = vst.msk [vmem:[#allocation3] sm:$0xff] %vm465, %v463
      %467 = vst.msk [vmem:[#allocation3 + $0x8] sm:$0xff] %vm465, %v464
      %v468 = vld [vmem:[#allocation4] sm:$0xff]
      %v469 = vld [vmem:[#allocation4 + $0x8] sm:$0xff]
      %471 = vset.pattern.permute.xlu0 0
      %472 = vperm.xlu0 %471, %v432
      %v473 = vpop.permute.xlu0 %472
      %476 = vset.pattern.permute.xlu0 0
      %477 = vperm.xlu0 %476, %v434
      %v478 = vpop.permute.xlu0 %477
      %v480 = vmul.f32 %v473, %v468
      %v481 = vmul.f32 %v478, %v469
      %v482 = vpack.c.bf16 %v452, %v451
      %v483 = vld [vmem:[%s318] sm:$0xf]
      %v485 = vsel %vm420, %v482, 0
      %vm487 = vcmask 1043456
      %v489 = vsel %vm487, %v483, 0
      %491 = vmatprep.subr.bf16.mxu0 0
      %492 = vmatpush1.bf16.msra.mxu0 %v489
      %493 = vmatprep.subr.bf16.mxu0 0
      %494 = vmatpush1.bf16.msra.mxu0 0
      %495 = vmatprep.subr.bf16.mxu0 0
      %496 = vmatpush1.bf16.msra.mxu0 0
      %497 = vmatprep.subr.bf16.mxu0 0
      %498 = vmatpush1.bf16.msra.mxu0 0
      %499 = vmatprep.subr.bf16.mxu0 0
      %500 = vmatpush1.bf16.msra.mxu0 0
      %501 = vmatprep.subr.bf16.mxu0 0
      %502 = vmatpush1.bf16.msra.mxu0 0
      %503 = vmatprep.subr.bf16.mxu0 0
      %504 = vmatpush1.bf16.msra.mxu0 0
      %505 = vmatprep.subr.bf16.mxu0 0
      %506 = vmatpush1.bf16.msra.mxu0 0
      %507 = vmatprep.subr.bf16.mxu0 0
      %508 = vmatpush1.bf16.msra.mxu0 0
      %509 = vmatprep.subr.bf16.mxu0 0
      %510 = vmatpush1.bf16.msra.mxu0 0
      %511 = vmatprep.subr.bf16.mxu0 0
      %512 = vmatpush1.bf16.msra.mxu0 0
      %513 = vmatprep.subr.bf16.mxu0 0
      %514 = vmatpush1.bf16.msra.mxu0 0
      %515 = vmatprep.subr.bf16.mxu0 0
      %516 = vmatpush1.bf16.msra.mxu0 0
      %517 = vmatprep.subr.bf16.mxu0 0
      %518 = vmatpush1.bf16.msra.mxu0 0
      %519 = vmatprep.subr.bf16.mxu0 0
      %520 = vmatpush1.bf16.msra.mxu0 0
      %521 = vmatprep.subr.bf16.mxu0 0
      %522 = vmatpush1.bf16.msra.mxu0 0
      %523 = vmatprep.mubr.bf16.mxu0 0
      %524 = vmatmul.mubr.bf16.gmra.mrb[0].mxu0 %v485
      %v525 = vpop.f32.mrb[0].mxu0
      %v526 = vadd.f32 0.0, %v525
      %v527 = vpop.f32.mrb[0].mxu0
      %v528 = vpop.f32.mrb[0].mxu0
      %v529 = vadd.f32 0.0, %v528
      %v530 = vpop.f32.mrb[0].mxu0
      %531 = vdwg.mxu0
      %v532 = vadd.f32 %v480, %v526
      %v533 = vadd.f32 %v481, %v529
      %534 = vst.msk [vmem:[#allocation4] sm:$0xff] %vm356, %v532
      %535 = vst.msk [vmem:[#allocation4 + $0x8] sm:$0xff] %vm356, %v533
      %536 = vst.msk [vmem:[#allocation2] sm:$0xff] %vm465, %v427
      %537 = vst.msk [vmem:[#allocation2 + $0x8] sm:$0xff] %vm465, %v428
      // Predicated region
      $region41: #{multi_head_attention.8} parent=35 // pred_check
        %p538 = pneg %p329
      $region42: #{multi_head_attention.8} parent=35 // pred_check_branch
        %540 = sbr.rel (%p538) target = $region44
      $region43: #{multi_head_attention.8} parent=35 // pred_region
        %v541 = vld [vmem:[#allocation4] sm:$0xff]
        %v542 = vld [vmem:[#allocation4 + $0x8] sm:$0xff]
        %v543 = vld [vmem:[#allocation3] sm:$0xff]
        %v544 = vld [vmem:[#allocation3 + $0x8] sm:$0xff]
        %v545 = vrcp.pop %v543
        %v546 = vrcp.pop %v544
        %548 = vset.pattern.permute.xlu0 0
        %549 = vperm.xlu0 %548, %v545
        %v550 = vpop.permute.xlu0 %549
        %553 = vset.pattern.permute.xlu0 0
        %554 = vperm.xlu0 %553, %v546
        %v555 = vpop.permute.xlu0 %554
        %v557 = vmul.f32 %v541, %v550
        %v558 = vmul.f32 %v542, %v555
        %v559 = vpack.c.bf16 %v558, %v557
        %v561 = vunpack.c.l.b16 %v559
        %v562 = vunpack.c.h.b16 %v559
        %v563 = vpack.c.b16 %v561, %v561
        %v564 = vpack.c.b16 %v562, %v562
        %vm567 = vcmask 125952
        %568 = vst.msk [vmem:[%s327] sm:$0xf] %vm567, %v563
        %569 = vst.msk [vmem:[%s327 + $0x4] sm:$0xf] %vm567, %v564
      $region44: #{multi_head_attention.8} parent=35 // pred_fallthru
        _
      %p570 = scmp.lt.s32.totalorder %s20, 1
      %s571 = scalar_select %p570, %s20, 1
      %p572 = scmp.lt.s32.totalorder %s21, 1
      %s573 = scalar_select %p572, %s21, 1
      %s574 = smul.addr %s573, 2
      %s575 = smul.addr %s571, 4
      %s576 = sadd.s32 %s574, %s575
      %s577 = smul.addr %s576, 4
      %s578 = scalar_lea.vmem %s4, %s577
      // Predicated region
      $region45: #{multi_head_attention.8} parent=35 // pred_check
        %p579 = pneg %p163
      $region46: #{multi_head_attention.8} parent=35 // pred_check_branch
        %581 = sbr.rel (%p579) target = $region48
      $region47: #{multi_head_attention.8} parent=35 // pred_region
        _
      $region48: #{multi_head_attention.8} parent=35 // pred_fallthru
        _
    $region36: #{multi_head_attention.8} parent=5 // pred_fallthru
      _
    %p582 = scmp.le.s32.totalorder 2, %s10
    // Predicated region
    $region49: #{multi_head_attention.8} parent=5 // pred_check
      %p583 = pneg %p582
    $region50: #{multi_head_attention.8} parent=5 // pred_check_branch
      %585 = sbr.rel (%p583) target = $region52
    $region51: #{multi_head_attention.8} parent=5 // pred_region
      %s586 = ssub.s32 %s10, 2
      // Predicated region
      $region53: #{multi_head_attention.8} parent=51 // pred_check
        %p587 = pneg %p169
      $region54: #{multi_head_attention.8} parent=51 // pred_check_branch
        %589 = sbr.rel (%p587) target = $region56
      $region55: #{multi_head_attention.8} parent=51 // pred_region
        %p590 = scmp.lt.s32.totalorder %s23, 1
        %s591 = scalar_select %p590, %s23, 1
        %p592 = scmp.lt.s32.totalorder %s24, 1
        %s593 = scalar_select %p592, %s24, 1
        %s594 = smul.addr %s593, 2
        %s595 = smul.addr %s591, 4
        %s596 = sadd.s32 %s594, %s595
        %s597 = smul.addr %s596, 4
        %s598 = scalar_lea.vmem %s4, %s597
      $region56: #{multi_head_attention.8} parent=51 // pred_fallthru
        _
    $region52: #{multi_head_attention.8} parent=5 // pred_fallthru
      _
  $region6: #{multi_head_attention.8} parent=0 // loop_footer
    %s14 = sadd.s32 1, %s10
  $region7: #{multi_head_attention.8} parent=0 // loop_footer_branch
    %9 = sbr.rel target = $region3
  $region8: #{multi_head_attention.8} parent=0 // loop_exit
    _

</llo_original>
